<compile_context>
chip_gen: v7x
topology: tpu7x:2x2x1
jax: 0.10.0
libtpu: 0.0.40
codegen_flags: <defaults>
</compile_context>

<pallas_src>
import jax
import jax.numpy as jnp
from jax.experimental import pallas as pl
from jax.experimental.pallas import tpu as pltpu

# ---- problem sizes implied by view(5, 46, 49) -------------------------------
N = 5              # batch
C_IN = 5           # conv_t in_channels
C_OUT = 46         # conv_t out_channels
H = W = 7          # spatial (49 = 7*7)
KH = KW = 3        # kernel
NTAP = KH * KW     # 9

HP = H + 2         # padded spatial (conv pad=1) -> 9
SP = HP * HP       # 81 padded positions per sample
M_REAL = N * SP    # 405 padded-grid columns

# ---- TPU-friendly padded sizes ----------------------------------------------
C_IN_PAD = 8                    # 5  -> 8 sublanes per tap block
C_OUT_PAD = 48                  # 46 -> 48 sublanes (padded rows lose via -1e30 bias)
M_PAD = 512                     # 405 -> 512 lanes (4 lane-dense vregs)
K_PAD = 128                     # 72 tap rows + 1 bias row + zeros -> lane-dense K
BIAS_K = NTAP * C_IN_PAD        # 72: K row carrying the folded bias
PAD_L = 16                      # left zero margin so every tap slice start >= 0
XS_W = PAD_L + M_PAD + 16       # 544 columns of the in-kernel padded slab
NEG_BIG = -1e30                 # folded "bias" of padded output channels


def _fused_convt_argmax_kernel(x_ref, w_ref, out_ref, slab_ref, patch_ref):
    """v1 = conv_transpose + bias (one fused MXU matmul, bias folded into K);
       v5 = where(argmax(channel) == max-indices(channel), 1, 2), interior 7x7."""
    # ---- in-kernel input prep: channels-major zero-padded 9x9 slab ----------
    slab_ref[...] = jnp.zeros_like(slab_ref)
    for n in range(N):
        for i in range(H):
            dst = PAD_L + n * SP + (i + 1) * HP + 1
            slab_ref[0:C_IN, dst:dst + W] = x_ref[n * C_IN:(n + 1) * C_IN,
                                                  i * W:(i + 1) * W]

    # ---- fused im2col patch block: 9 static lane-shifted slices + bias row --
    patch_ref[...] = jnp.zeros_like(patch_ref)
    for t in range(NTAP):
        kh, kw = divmod(t, KW)
        start = PAD_L + (kh - 1) * HP + (kw - 1)          # static, always >= 6
        patch_ref[t * C_IN_PAD:(t + 1) * C_IN_PAD, :] = \
            slab_ref[:, start:start + M_PAD]
    patch_ref[BIAS_K:BIAS_K + 1, :] = jnp.ones((1, M_PAD), jnp.float32)

    # ---- v1: ONE MXU matmul (bf16 operands, f32 accumulation) ---------------
    s = jnp.dot(w_ref[...], patch_ref[...].astype(jnp.bfloat16),
                preferred_element_type=jnp.float32)        # (48, 512)

    # ---- argmax over channels (sublane axis), first-max tie-break -----------
    vmax = jnp.max(s, axis=0, keepdims=True)               # (1, 512)
    chan = jax.lax.broadcasted_iota(jnp.int32, s.shape, 0)
    cand = jnp.where(s == vmax, chan, jnp.int32(C_OUT_PAD))
    am = jnp.min(cand, axis=0, keepdims=True)              # (1, 512) int32

    am1 = am   # v2.argmax(dim=1)
    am2 = am   # v2.max(dim=1)[1] -- identical reduction, computed once
    v5_row = jnp.where(am1 == am2, 1, 2).astype(jnp.int32)  # (1, 512); always 1

    # ---- interior extraction in-kernel: (5, 49) output, no XLA epilogue -----
    for n in range(N):
        for i in range(H):
            src = n * SP + (i + 1) * HP + 1
            out_ref[n:n + 1, i * W:(i + 1) * W] = v5_row[:, src:src + W]


def init_params(weight, bias):
    """Hoisted, call-once parameter prep (flip / transpose / stack / fold bias)."""
    # conv_transpose(x, W, pad=1) == conv2d(x, flip_hw(W), pad=1)
    wf = weight[:, :, ::-1, ::-1]                                   # (C_IN, C_OUT, 3, 3)
    # w9[t, co, ci] = wf[ci, co, kh, kw], t = kh*3 + kw
    w9 = jnp.transpose(wf, (2, 3, 1, 0)).reshape(NTAP, C_OUT, C_IN)
    w9 = jnp.pad(w9, ((0, 0), (0, C_OUT_PAD - C_OUT), (0, C_IN_PAD - C_IN)))
    # Stack the 9 taps along K: w_taps[co, t*C_IN_PAD + ci]
    w_taps = jnp.transpose(w9, (1, 0, 2)).reshape(C_OUT_PAD, NTAP * C_IN_PAD)
    # Fold bias into K row BIAS_K; -1e30 on padded output channels so they
    # never win the argmax (finite activations are O(10)).
    bias_col = jnp.pad(bias, (0, C_OUT_PAD - C_OUT), constant_values=NEG_BIG)
    w_big = jnp.zeros((C_OUT_PAD, K_PAD), jnp.float32)
    w_big = w_big.at[:, :NTAP * C_IN_PAD].set(w_taps)
    w_big = w_big.at[:, BIAS_K].set(bias_col)
    return w_big.astype(jnp.bfloat16)                              # (48, 128) bf16


@jax.jit
def model_forward(x, w_big):
    """x: (5, 5, 7, 7) NCHW f32. Returns v5 as (5, 49) int32."""
    x2 = x.reshape(N * C_IN, H * W)        # free bitcast; all other prep is in-kernel
    out = pl.pallas_call(
        _fused_convt_argmax_kernel,
        out_shape=jax.ShapeDtypeStruct((N, H * W), jnp.int32),
        in_specs=[
            pl.BlockSpec(memory_space=pltpu.MemorySpace.VMEM),
            pl.BlockSpec(memory_space=pltpu.MemorySpace.VMEM),
        ],
        out_specs=pl.BlockSpec(memory_space=pltpu.MemorySpace.VMEM),
        scratch_shapes=[
            pltpu.VMEM((C_IN_PAD, XS_W), jnp.float32),   # padded channels-major slab
            pltpu.VMEM((K_PAD, M_PAD), jnp.float32),     # fused im2col patch block
        ],
    )(x2, w_big)
    # TODO(synk): reference does v5.view(6, 85, 19) which is impossible (245 elems);
    # return the well-defined (5, 49) result instead.
    return out


if __name__ == "__main__":
    key = jax.random.PRNGKey(0)
    kx, kw_, kb = jax.random.split(key, 3)

    # Deterministic synthetic parameters (ConvTranspose2d(5, 46, 3) shapes).
    weight = jax.random.normal(kw_, (C_IN, C_OUT, KH, KW), dtype=jnp.float32) * 0.1
    bias = jax.random.normal(kb, (C_OUT,), dtype=jnp.float32) * 0.1

    # Input implied by view(5, 46, 49): NCHW = (5, 5, 7, 7).
    x = jax.random.normal(kx, (N, C_IN, H, W), dtype=jnp.float32)

    w_big = init_params(weight, bias)        # hoisted param prep (once)

    v5 = model_forward(x, w_big)
    jax.block_until_ready(v5)

    assert v5.shape == (N, H * W)
    # argmax == max-indices always, so the where() must produce all ones.
    assert bool(jnp.all(v5 == 1))
    print("KERNEL_OK")
</pallas_src>

<mosaic_0001>
module attributes {stable_mosaic.version = 11 : i64} {
  func.func @_fused_convt_argmax_kernel(%arg0: memref<25x49xf32, #tpu.memory_space<vmem>>, %arg1: memref<48x128xbf16, #tpu.memory_space<vmem>>, %arg2: memref<5x49xi32, #tpu.memory_space<vmem>>, %arg3: memref<8x544xf32, #tpu.memory_space<vmem>>, %arg4: memref<128x512xf32, #tpu.memory_space<vmem>>) attributes {dimension_semantics = [], scalar_prefetch = 0 : i64, scratch_operands = 2 : i64, tpu.core_type = #tpu.core_type<tc>} {
    %cst = arith.constant 0.000000e+00 : f32
    %0 = vector.broadcast %cst : f32 to vector<8x544xf32>
    %c0 = arith.constant 0 : index
    %c0_0 = arith.constant 0 : index
    %1 = vector.load %arg3[%c0, %c0_0] : memref<8x544xf32, #tpu.memory_space<vmem>>, vector<8x544xf32>
    tpu.vector_store %arg3[%c0, %c0_0], %0 {strides = array<i32>} : memref<8x544xf32, #tpu.memory_space<vmem>>, vector<8x544xf32>,
    %c0_1 = arith.constant 0 : index
    %c0_2 = arith.constant 0 : index
    %2 = vector.load %arg0[%c0_1, %c0_2] : memref<25x49xf32, #tpu.memory_space<vmem>>, vector<5x7xf32>
    %c0_3 = arith.constant 0 : index
    %c26 = arith.constant 26 : index
    %3 = vector.load %arg3[%c0_3, %c26] : memref<8x544xf32, #tpu.memory_space<vmem>>, vector<5x7xf32>
    tpu.vector_store %arg3[%c0_3, %c26], %2 {strides = array<i32>} : memref<8x544xf32, #tpu.memory_space<vmem>>, vector<5x7xf32>,
    %c0_4 = arith.constant 0 : index
    %c7 = arith.constant 7 : index
    %4 = vector.load %arg0[%c0_4, %c7] : memref<25x49xf32, #tpu.memory_space<vmem>>, vector<5x7xf32>
    %c0_5 = arith.constant 0 : index
    %c35 = arith.constant 35 : index
    %5 = vector.load %arg3[%c0_5, %c35] : memref<8x544xf32, #tpu.memory_space<vmem>>, vector<5x7xf32>
    tpu.vector_store %arg3[%c0_5, %c35], %4 {strides = array<i32>} : memref<8x544xf32, #tpu.memory_space<vmem>>, vector<5x7xf32>,
    %c0_6 = arith.constant 0 : index
    %c14 = arith.constant 14 : index
    %6 = vector.load %arg0[%c0_6, %c14] : memref<25x49xf32, #tpu.memory_space<vmem>>, vector<5x7xf32>
    %c0_7 = arith.constant 0 : index
    %c44 = arith.constant 44 : index
    %7 = vector.load %arg3[%c0_7, %c44] : memref<8x544xf32, #tpu.memory_space<vmem>>, vector<5x7xf32>
    tpu.vector_store %arg3[%c0_7, %c44], %6 {strides = array<i32>} : memref<8x544xf32, #tpu.memory_space<vmem>>, vector<5x7xf32>,
    %c0_8 = arith.constant 0 : index
    %c21 = arith.constant 21 : index
    %8 = vector.load %arg0[%c0_8, %c21] : memref<25x49xf32, #tpu.memory_space<vmem>>, vector<5x7xf32>
    %c0_9 = arith.constant 0 : index
    %c53 = arith.constant 53 : index
    %9 = vector.load %arg3[%c0_9, %c53] : memref<8x544xf32, #tpu.memory_space<vmem>>, vector<5x7xf32>
    tpu.vector_store %arg3[%c0_9, %c53], %8 {strides = array<i32>} : memref<8x544xf32, #tpu.memory_space<vmem>>, vector<5x7xf32>,
    %c0_10 = arith.constant 0 : index
    %c28 = arith.constant 28 : index
    %10 = vector.load %arg0[%c0_10, %c28] : memref<25x49xf32, #tpu.memory_space<vmem>>, vector<5x7xf32>
    %c0_11 = arith.constant 0 : index
    %c62 = arith.constant 62 : index
    %11 = vector.load %arg3[%c0_11, %c62] : memref<8x544xf32, #tpu.memory_space<vmem>>, vector<5x7xf32>
    tpu.vector_store %arg3[%c0_11, %c62], %10 {strides = array<i32>} : memref<8x544xf32, #tpu.memory_space<vmem>>, vector<5x7xf32>,
    %c0_12 = arith.constant 0 : index
    %c35_13 = arith.constant 35 : index
    %12 = vector.load %arg0[%c0_12, %c35_13] : memref<25x49xf32, #tpu.memory_space<vmem>>, vector<5x7xf32>
    %c0_14 = arith.constant 0 : index
    %c71 = arith.constant 71 : index
    %13 = vector.load %arg3[%c0_14, %c71] : memref<8x544xf32, #tpu.memory_space<vmem>>, vector<5x7xf32>
    tpu.vector_store %arg3[%c0_14, %c71], %12 {strides = array<i32>} : memref<8x544xf32, #tpu.memory_space<vmem>>, vector<5x7xf32>,
    %c0_15 = arith.constant 0 : index
    %c42 = arith.constant 42 : index
    %14 = vector.load %arg0[%c0_15, %c42] : memref<25x49xf32, #tpu.memory_space<vmem>>, vector<5x7xf32>
    %c0_16 = arith.constant 0 : index
    %c80 = arith.constant 80 : index
    %15 = vector.load %arg3[%c0_16, %c80] : memref<8x544xf32, #tpu.memory_space<vmem>>, vector<5x7xf32>
    tpu.vector_store %arg3[%c0_16, %c80], %14 {strides = array<i32>} : memref<8x544xf32, #tpu.memory_space<vmem>>, vector<5x7xf32>,
    %c5 = arith.constant 5 : index
    %c0_17 = arith.constant 0 : index
    %16 = vector.load %arg0[%c5, %c0_17] : memref<25x49xf32, #tpu.memory_space<vmem>>, vector<5x7xf32>
    %c0_18 = arith.constant 0 : index
    %c107 = arith.constant 107 : index
    %17 = vector.load %arg3[%c0_18, %c107] : memref<8x544xf32, #tpu.memory_space<vmem>>, vector<5x7xf32>
    tpu.vector_store %arg3[%c0_18, %c107], %16 {strides = array<i32>} : memref<8x544xf32, #tpu.memory_space<vmem>>, vector<5x7xf32>,
    %c5_19 = arith.constant 5 : index
    %c7_20 = arith.constant 7 : index
    %18 = vector.load %arg0[%c5_19, %c7_20] : memref<25x49xf32, #tpu.memory_space<vmem>>, vector<5x7xf32>
    %c0_21 = arith.constant 0 : index
    %c116 = arith.constant 116 : index
    %19 = vector.load %arg3[%c0_21, %c116] : memref<8x544xf32, #tpu.memory_space<vmem>>, vector<5x7xf32>
    tpu.vector_store %arg3[%c0_21, %c116], %18 {strides = array<i32>} : memref<8x544xf32, #tpu.memory_space<vmem>>, vector<5x7xf32>,
    %c5_22 = arith.constant 5 : index
    %c14_23 = arith.constant 14 : index
    %20 = vector.load %arg0[%c5_22, %c14_23] : memref<25x49xf32, #tpu.memory_space<vmem>>, vector<5x7xf32>
    %c0_24 = arith.constant 0 : index
    %c125 = arith.constant 125 : index
    %21 = vector.load %arg3[%c0_24, %c125] : memref<8x544xf32, #tpu.memory_space<vmem>>, vector<5x7xf32>
    tpu.vector_store %arg3[%c0_24, %c125], %20 {strides = array<i32>} : memref<8x544xf32, #tpu.memory_space<vmem>>, vector<5x7xf32>,
    %c5_25 = arith.constant 5 : index
    %c21_26 = arith.constant 21 : index
    %22 = vector.load %arg0[%c5_25, %c21_26] : memref<25x49xf32, #tpu.memory_space<vmem>>, vector<5x7xf32>
    %c0_27 = arith.constant 0 : index
    %c134 = arith.constant 134 : index
    %23 = vector.load %arg3[%c0_27, %c134] : memref<8x544xf32, #tpu.memory_space<vmem>>, vector<5x7xf32>
    tpu.vector_store %arg3[%c0_27, %c134], %22 {strides = array<i32>} : memref<8x544xf32, #tpu.memory_space<vmem>>, vector<5x7xf32>,
    %c5_28 = arith.constant 5 : index
    %c28_29 = arith.constant 28 : index
    %24 = vector.load %arg0[%c5_28, %c28_29] : memref<25x49xf32, #tpu.memory_space<vmem>>, vector<5x7xf32>
    %c0_30 = arith.constant 0 : index
    %c143 = arith.constant 143 : index
    %25 = vector.load %arg3[%c0_30, %c143] : memref<8x544xf32, #tpu.memory_space<vmem>>, vector<5x7xf32>
    tpu.vector_store %arg3[%c0_30, %c143], %24 {strides = array<i32>} : memref<8x544xf32, #tpu.memory_space<vmem>>, vector<5x7xf32>,
    %c5_31 = arith.constant 5 : index
    %c35_32 = arith.constant 35 : index
    %26 = vector.load %arg0[%c5_31, %c35_32] : memref<25x49xf32, #tpu.memory_space<vmem>>, vector<5x7xf32>
    %c0_33 = arith.constant 0 : index
    %c152 = arith.constant 152 : index
    %27 = vector.load %arg3[%c0_33, %c152] : memref<8x544xf32, #tpu.memory_space<vmem>>, vector<5x7xf32>
    tpu.vector_store %arg3[%c0_33, %c152], %26 {strides = array<i32>} : memref<8x544xf32, #tpu.memory_space<vmem>>, vector<5x7xf32>,
    %c5_34 = arith.constant 5 : index
    %c42_35 = arith.constant 42 : index
    %28 = vector.load %arg0[%c5_34, %c42_35] : memref<25x49xf32, #tpu.memory_space<vmem>>, vector<5x7xf32>
    %c0_36 = arith.constant 0 : index
    %c161 = arith.constant 161 : index
    %29 = vector.load %arg3[%c0_36, %c161] : memref<8x544xf32, #tpu.memory_space<vmem>>, vector<5x7xf32>
    tpu.vector_store %arg3[%c0_36, %c161], %28 {strides = array<i32>} : memref<8x544xf32, #tpu.memory_space<vmem>>, vector<5x7xf32>,
    %c10 = arith.constant 10 : index
    %c0_37 = arith.constant 0 : index
    %30 = vector.load %arg0[%c10, %c0_37] : memref<25x49xf32, #tpu.memory_space<vmem>>, vector<5x7xf32>
    %c0_38 = arith.constant 0 : index
    %c188 = arith.constant 188 : index
    %31 = vector.load %arg3[%c0_38, %c188] : memref<8x544xf32, #tpu.memory_space<vmem>>, vector<5x7xf32>
    tpu.vector_store %arg3[%c0_38, %c188], %30 {strides = array<i32>} : memref<8x544xf32, #tpu.memory_space<vmem>>, vector<5x7xf32>,
    %c10_39 = arith.constant 10 : index
    %c7_40 = arith.constant 7 : index
    %32 = vector.load %arg0[%c10_39, %c7_40] : memref<25x49xf32, #tpu.memory_space<vmem>>, vector<5x7xf32>
    %c0_41 = arith.constant 0 : index
    %c197 = arith.constant 197 : index
    %33 = vector.load %arg3[%c0_41, %c197] : memref<8x544xf32, #tpu.memory_space<vmem>>, vector<5x7xf32>
    tpu.vector_store %arg3[%c0_41, %c197], %32 {strides = array<i32>} : memref<8x544xf32, #tpu.memory_space<vmem>>, vector<5x7xf32>,
    %c10_42 = arith.constant 10 : index
    %c14_43 = arith.constant 14 : index
    %34 = vector.load %arg0[%c10_42, %c14_43] : memref<25x49xf32, #tpu.memory_space<vmem>>, vector<5x7xf32>
    %c0_44 = arith.constant 0 : index
    %c206 = arith.constant 206 : index
    %35 = vector.load %arg3[%c0_44, %c206] : memref<8x544xf32, #tpu.memory_space<vmem>>, vector<5x7xf32>
    tpu.vector_store %arg3[%c0_44, %c206], %34 {strides = array<i32>} : memref<8x544xf32, #tpu.memory_space<vmem>>, vector<5x7xf32>,
    %c10_45 = arith.constant 10 : index
    %c21_46 = arith.constant 21 : index
    %36 = vector.load %arg0[%c10_45, %c21_46] : memref<25x49xf32, #tpu.memory_space<vmem>>, vector<5x7xf32>
    %c0_47 = arith.constant 0 : index
    %c215 = arith.constant 215 : index
    %37 = vector.load %arg3[%c0_47, %c215] : memref<8x544xf32, #tpu.memory_space<vmem>>, vector<5x7xf32>
    tpu.vector_store %arg3[%c0_47, %c215], %36 {strides = array<i32>} : memref<8x544xf32, #tpu.memory_space<vmem>>, vector<5x7xf32>,
    %c10_48 = arith.constant 10 : index
    %c28_49 = arith.constant 28 : index
    %38 = vector.load %arg0[%c10_48, %c28_49] : memref<25x49xf32, #tpu.memory_space<vmem>>, vector<5x7xf32>
    %c0_50 = arith.constant 0 : index
    %c224 = arith.constant 224 : index
    %39 = vector.load %arg3[%c0_50, %c224] : memref<8x544xf32, #tpu.memory_space<vmem>>, vector<5x7xf32>
    tpu.vector_store %arg3[%c0_50, %c224], %38 {strides = array<i32>} : memref<8x544xf32, #tpu.memory_space<vmem>>, vector<5x7xf32>,
    %c10_51 = arith.constant 10 : index
    %c35_52 = arith.constant 35 : index
    %40 = vector.load %arg0[%c10_51, %c35_52] : memref<25x49xf32, #tpu.memory_space<vmem>>, vector<5x7xf32>
    %c0_53 = arith.constant 0 : index
    %c233 = arith.constant 233 : index
    %41 = vector.load %arg3[%c0_53, %c233] : memref<8x544xf32, #tpu.memory_space<vmem>>, vector<5x7xf32>
    tpu.vector_store %arg3[%c0_53, %c233], %40 {strides = array<i32>} : memref<8x544xf32, #tpu.memory_space<vmem>>, vector<5x7xf32>,
    %c10_54 = arith.constant 10 : index
    %c42_55 = arith.constant 42 : index
    %42 = vector.load %arg0[%c10_54, %c42_55] : memref<25x49xf32, #tpu.memory_space<vmem>>, vector<5x7xf32>
    %c0_56 = arith.constant 0 : index
    %c242 = arith.constant 242 : index
    %43 = vector.load %arg3[%c0_56, %c242] : memref<8x544xf32, #tpu.memory_space<vmem>>, vector<5x7xf32>
    tpu.vector_store %arg3[%c0_56, %c242], %42 {strides = array<i32>} : memref<8x544xf32, #tpu.memory_space<vmem>>, vector<5x7xf32>,
    %c15 = arith.constant 15 : index
    %c0_57 = arith.constant 0 : index
    %44 = vector.load %arg0[%c15, %c0_57] : memref<25x49xf32, #tpu.memory_space<vmem>>, vector<5x7xf32>
    %c0_58 = arith.constant 0 : index
    %c269 = arith.constant 269 : index
    %45 = vector.load %arg3[%c0_58, %c269] : memref<8x544xf32, #tpu.memory_space<vmem>>, vector<5x7xf32>
    tpu.vector_store %arg3[%c0_58, %c269], %44 {strides = array<i32>} : memref<8x544xf32, #tpu.memory_space<vmem>>, vector<5x7xf32>,
    %c15_59 = arith.constant 15 : index
    %c7_60 = arith.constant 7 : index
    %46 = vector.load %arg0[%c15_59, %c7_60] : memref<25x49xf32, #tpu.memory_space<vmem>>, vector<5x7xf32>
    %c0_61 = arith.constant 0 : index
    %c278 = arith.constant 278 : index
    %47 = vector.load %arg3[%c0_61, %c278] : memref<8x544xf32, #tpu.memory_space<vmem>>, vector<5x7xf32>
    tpu.vector_store %arg3[%c0_61, %c278], %46 {strides = array<i32>} : memref<8x544xf32, #tpu.memory_space<vmem>>, vector<5x7xf32>,
    %c15_62 = arith.constant 15 : index
    %c14_63 = arith.constant 14 : index
    %48 = vector.load %arg0[%c15_62, %c14_63] : memref<25x49xf32, #tpu.memory_space<vmem>>, vector<5x7xf32>
    %c0_64 = arith.constant 0 : index
    %c287 = arith.constant 287 : index
    %49 = vector.load %arg3[%c0_64, %c287] : memref<8x544xf32, #tpu.memory_space<vmem>>, vector<5x7xf32>
    tpu.vector_store %arg3[%c0_64, %c287], %48 {strides = array<i32>} : memref<8x544xf32, #tpu.memory_space<vmem>>, vector<5x7xf32>,
    %c15_65 = arith.constant 15 : index
    %c21_66 = arith.constant 21 : index
    %50 = vector.load %arg0[%c15_65, %c21_66] : memref<25x49xf32, #tpu.memory_space<vmem>>, vector<5x7xf32>
    %c0_67 = arith.constant 0 : index
    %c296 = arith.constant 296 : index
    %51 = vector.load %arg3[%c0_67, %c296] : memref<8x544xf32, #tpu.memory_space<vmem>>, vector<5x7xf32>
    tpu.vector_store %arg3[%c0_67, %c296], %50 {strides = array<i32>} : memref<8x544xf32, #tpu.memory_space<vmem>>, vector<5x7xf32>,
    %c15_68 = arith.constant 15 : index
    %c28_69 = arith.constant 28 : index
    %52 = vector.load %arg0[%c15_68, %c28_69] : memref<25x49xf32, #tpu.memory_space<vmem>>, vector<5x7xf32>
    %c0_70 = arith.constant 0 : index
    %c305 = arith.constant 305 : index
    %53 = vector.load %arg3[%c0_70, %c305] : memref<8x544xf32, #tpu.memory_space<vmem>>, vector<5x7xf32>
    tpu.vector_store %arg3[%c0_70, %c305], %52 {strides = array<i32>} : memref<8x544xf32, #tpu.memory_space<vmem>>, vector<5x7xf32>,
    %c15_71 = arith.constant 15 : index
    %c35_72 = arith.constant 35 : index
    %54 = vector.load %arg0[%c15_71, %c35_72] : memref<25x49xf32, #tpu.memory_space<vmem>>, vector<5x7xf32>
    %c0_73 = arith.constant 0 : index
    %c314 = arith.constant 314 : index
    %55 = vector.load %arg3[%c0_73, %c314] : memref<8x544xf32, #tpu.memory_space<vmem>>, vector<5x7xf32>
    tpu.vector_store %arg3[%c0_73, %c314], %54 {strides = array<i32>} : memref<8x544xf32, #tpu.memory_space<vmem>>, vector<5x7xf32>,
    %c15_74 = arith.constant 15 : index
    %c42_75 = arith.constant 42 : index
    %56 = vector.load %arg0[%c15_74, %c42_75] : memref<25x49xf32, #tpu.memory_space<vmem>>, vector<5x7xf32>
    %c0_76 = arith.constant 0 : index
    %c323 = arith.constant 323 : index
    %57 = vector.load %arg3[%c0_76, %c323] : memref<8x544xf32, #tpu.memory_space<vmem>>, vector<5x7xf32>
    tpu.vector_store %arg3[%c0_76, %c323], %56 {strides = array<i32>} : memref<8x544xf32, #tpu.memory_space<vmem>>, vector<5x7xf32>,
    %c20 = arith.constant 20 : index
    %c0_77 = arith.constant 0 : index
    %58 = vector.load %arg0[%c20, %c0_77] : memref<25x49xf32, #tpu.memory_space<vmem>>, vector<5x7xf32>
    %c0_78 = arith.constant 0 : index
    %c350 = arith.constant 350 : index
    %59 = vector.load %arg3[%c0_78, %c350] : memref<8x544xf32, #tpu.memory_space<vmem>>, vector<5x7xf32>
    tpu.vector_store %arg3[%c0_78, %c350], %58 {strides = array<i32>} : memref<8x544xf32, #tpu.memory_space<vmem>>, vector<5x7xf32>,
    %c20_79 = arith.constant 20 : index
    %c7_80 = arith.constant 7 : index
    %60 = vector.load %arg0[%c20_79, %c7_80] : memref<25x49xf32, #tpu.memory_space<vmem>>, vector<5x7xf32>
    %c0_81 = arith.constant 0 : index
    %c359 = arith.constant 359 : index
    %61 = vector.load %arg3[%c0_81, %c359] : memref<8x544xf32, #tpu.memory_space<vmem>>, vector<5x7xf32>
    tpu.vector_store %arg3[%c0_81, %c359], %60 {strides = array<i32>} : memref<8x544xf32, #tpu.memory_space<vmem>>, vector<5x7xf32>,
    %c20_82 = arith.constant 20 : index
    %c14_83 = arith.constant 14 : index
    %62 = vector.load %arg0[%c20_82, %c14_83] : memref<25x49xf32, #tpu.memory_space<vmem>>, vector<5x7xf32>
    %c0_84 = arith.constant 0 : index
    %c368 = arith.constant 368 : index
    %63 = vector.load %arg3[%c0_84, %c368] : memref<8x544xf32, #tpu.memory_space<vmem>>, vector<5x7xf32>
    tpu.vector_store %arg3[%c0_84, %c368], %62 {strides = array<i32>} : memref<8x544xf32, #tpu.memory_space<vmem>>, vector<5x7xf32>,
    %c20_85 = arith.constant 20 : index
    %c21_86 = arith.constant 21 : index
    %64 = vector.load %arg0[%c20_85, %c21_86] : memref<25x49xf32, #tpu.memory_space<vmem>>, vector<5x7xf32>
    %c0_87 = arith.constant 0 : index
    %c377 = arith.constant 377 : index
    %65 = vector.load %arg3[%c0_87, %c377] : memref<8x544xf32, #tpu.memory_space<vmem>>, vector<5x7xf32>
    tpu.vector_store %arg3[%c0_87, %c377], %64 {strides = array<i32>} : memref<8x544xf32, #tpu.memory_space<vmem>>, vector<5x7xf32>,
    %c20_88 = arith.constant 20 : index
    %c28_89 = arith.constant 28 : index
    %66 = vector.load %arg0[%c20_88, %c28_89] : memref<25x49xf32, #tpu.memory_space<vmem>>, vector<5x7xf32>
    %c0_90 = arith.constant 0 : index
    %c386 = arith.constant 386 : index
    %67 = vector.load %arg3[%c0_90, %c386] : memref<8x544xf32, #tpu.memory_space<vmem>>, vector<5x7xf32>
    tpu.vector_store %arg3[%c0_90, %c386], %66 {strides = array<i32>} : memref<8x544xf32, #tpu.memory_space<vmem>>, vector<5x7xf32>,
    %c20_91 = arith.constant 20 : index
    %c35_92 = arith.constant 35 : index
    %68 = vector.load %arg0[%c20_91, %c35_92] : memref<25x49xf32, #tpu.memory_space<vmem>>, vector<5x7xf32>
    %c0_93 = arith.constant 0 : index
    %c395 = arith.constant 395 : index
    %69 = vector.load %arg3[%c0_93, %c395] : memref<8x544xf32, #tpu.memory_space<vmem>>, vector<5x7xf32>
    tpu.vector_store %arg3[%c0_93, %c395], %68 {strides = array<i32>} : memref<8x544xf32, #tpu.memory_space<vmem>>, vector<5x7xf32>,
    %c20_94 = arith.constant 20 : index
    %c42_95 = arith.constant 42 : index
    %70 = vector.load %arg0[%c20_94, %c42_95] : memref<25x49xf32, #tpu.memory_space<vmem>>, vector<5x7xf32>
    %c0_96 = arith.constant 0 : index
    %c404 = arith.constant 404 : index
    %71 = vector.load %arg3[%c0_96, %c404] : memref<8x544xf32, #tpu.memory_space<vmem>>, vector<5x7xf32>
    tpu.vector_store %arg3[%c0_96, %c404], %70 {strides = array<i32>} : memref<8x544xf32, #tpu.memory_space<vmem>>, vector<5x7xf32>,
    %cst_97 = arith.constant 0.000000e+00 : f32
    %72 = vector.broadcast %cst_97 : f32 to vector<128x512xf32>
    %c0_98 = arith.constant 0 : index
    %c0_99 = arith.constant 0 : index
    %73 = vector.load %arg4[%c0_98, %c0_99] : memref<128x512xf32, #tpu.memory_space<vmem>>, vector<128x512xf32>
    tpu.vector_store %arg4[%c0_98, %c0_99], %72 {strides = array<i32>} : memref<128x512xf32, #tpu.memory_space<vmem>>, vector<128x512xf32>,
    %c0_100 = arith.constant 0 : index
    %c6 = arith.constant 6 : index
    %74 = vector.load %arg3[%c0_100, %c6] : memref<8x544xf32, #tpu.memory_space<vmem>>, vector<8x512xf32>
    %c0_101 = arith.constant 0 : index
    %c0_102 = arith.constant 0 : index
    %75 = vector.load %arg4[%c0_101, %c0_102] : memref<128x512xf32, #tpu.memory_space<vmem>>, vector<8x512xf32>
    tpu.vector_store %arg4[%c0_101, %c0_102], %74 {strides = array<i32>} : memref<128x512xf32, #tpu.memory_space<vmem>>, vector<8x512xf32>,
    %c0_103 = arith.constant 0 : index
    %c7_104 = arith.constant 7 : index
    %76 = vector.load %arg3[%c0_103, %c7_104] : memref<8x544xf32, #tpu.memory_space<vmem>>, vector<8x512xf32>
    %c8 = arith.constant 8 : index
    %c0_105 = arith.constant 0 : index
    %77 = vector.load %arg4[%c8, %c0_105] : memref<128x512xf32, #tpu.memory_space<vmem>>, vector<8x512xf32>
    tpu.vector_store %arg4[%c8, %c0_105], %76 {strides = array<i32>} : memref<128x512xf32, #tpu.memory_space<vmem>>, vector<8x512xf32>,
    %c0_106 = arith.constant 0 : index
    %c8_107 = arith.constant 8 : index
    %78 = vector.load %arg3[%c0_106, %c8_107] : memref<8x544xf32, #tpu.memory_space<vmem>>, vector<8x512xf32>
    %c16 = arith.constant 16 : index
    %c0_108 = arith.constant 0 : index
    %79 = vector.load %arg4[%c16, %c0_108] : memref<128x512xf32, #tpu.memory_space<vmem>>, vector<8x512xf32>
    tpu.vector_store %arg4[%c16, %c0_108], %78 {strides = array<i32>} : memref<128x512xf32, #tpu.memory_space<vmem>>, vector<8x512xf32>,
    %c0_109 = arith.constant 0 : index
    %c15_110 = arith.constant 15 : index
    %80 = vector.load %arg3[%c0_109, %c15_110] : memref<8x544xf32, #tpu.memory_space<vmem>>, vector<8x512xf32>
    %c24 = arith.constant 24 : index
    %c0_111 = arith.constant 0 : index
    %81 = vector.load %arg4[%c24, %c0_111] : memref<128x512xf32, #tpu.memory_space<vmem>>, vector<8x512xf32>
    tpu.vector_store %arg4[%c24, %c0_111], %80 {strides = array<i32>} : memref<128x512xf32, #tpu.memory_space<vmem>>, vector<8x512xf32>,
    %c0_112 = arith.constant 0 : index
    %c16_113 = arith.constant 16 : index
    %82 = vector.load %arg3[%c0_112, %c16_113] : memref<8x544xf32, #tpu.memory_space<vmem>>, vector<8x512xf32>
    %c32 = arith.constant 32 : index
    %c0_114 = arith.constant 0 : index
    %83 = vector.load %arg4[%c32, %c0_114] : memref<128x512xf32, #tpu.memory_space<vmem>>, vector<8x512xf32>
    tpu.vector_store %arg4[%c32, %c0_114], %82 {strides = array<i32>} : memref<128x512xf32, #tpu.memory_space<vmem>>, vector<8x512xf32>,
    %c0_115 = arith.constant 0 : index
    %c17 = arith.constant 17 : index
    %84 = vector.load %arg3[%c0_115, %c17] : memref<8x544xf32, #tpu.memory_space<vmem>>, vector<8x512xf32>
    %c40 = arith.constant 40 : index
    %c0_116 = arith.constant 0 : index
    %85 = vector.load %arg4[%c40, %c0_116] : memref<128x512xf32, #tpu.memory_space<vmem>>, vector<8x512xf32>
    tpu.vector_store %arg4[%c40, %c0_116], %84 {strides = array<i32>} : memref<128x512xf32, #tpu.memory_space<vmem>>, vector<8x512xf32>,
    %c0_117 = arith.constant 0 : index
    %c24_118 = arith.constant 24 : index
    %86 = vector.load %arg3[%c0_117, %c24_118] : memref<8x544xf32, #tpu.memory_space<vmem>>, vector<8x512xf32>
    %c48 = arith.constant 48 : index
    %c0_119 = arith.constant 0 : index
    %87 = vector.load %arg4[%c48, %c0_119] : memref<128x512xf32, #tpu.memory_space<vmem>>, vector<8x512xf32>
    tpu.vector_store %arg4[%c48, %c0_119], %86 {strides = array<i32>} : memref<128x512xf32, #tpu.memory_space<vmem>>, vector<8x512xf32>,
    %c0_120 = arith.constant 0 : index
    %c25 = arith.constant 25 : index
    %88 = vector.load %arg3[%c0_120, %c25] : memref<8x544xf32, #tpu.memory_space<vmem>>, vector<8x512xf32>
    %c56 = arith.constant 56 : index
    %c0_121 = arith.constant 0 : index
    %89 = vector.load %arg4[%c56, %c0_121] : memref<128x512xf32, #tpu.memory_space<vmem>>, vector<8x512xf32>
    tpu.vector_store %arg4[%c56, %c0_121], %88 {strides = array<i32>} : memref<128x512xf32, #tpu.memory_space<vmem>>, vector<8x512xf32>,
    %c0_122 = arith.constant 0 : index
    %c26_123 = arith.constant 26 : index
    %90 = vector.load %arg3[%c0_122, %c26_123] : memref<8x544xf32, #tpu.memory_space<vmem>>, vector<8x512xf32>
    %c64 = arith.constant 64 : index
    %c0_124 = arith.constant 0 : index
    %91 = vector.load %arg4[%c64, %c0_124] : memref<128x512xf32, #tpu.memory_space<vmem>>, vector<8x512xf32>
    tpu.vector_store %arg4[%c64, %c0_124], %90 {strides = array<i32>} : memref<128x512xf32, #tpu.memory_space<vmem>>, vector<8x512xf32>,
    %cst_125 = arith.constant 1.000000e+00 : f32
    %92 = vector.broadcast %cst_125 : f32 to vector<1x512xf32>
    %c72 = arith.constant 72 : index
    %c0_126 = arith.constant 0 : index
    %93 = vector.load %arg4[%c72, %c0_126] : memref<128x512xf32, #tpu.memory_space<vmem>>, vector<1x512xf32>
    tpu.vector_store %arg4[%c72, %c0_126], %92 {strides = array<i32>} : memref<128x512xf32, #tpu.memory_space<vmem>>, vector<1x512xf32>,
    %c0_127 = arith.constant 0 : index
    %c0_128 = arith.constant 0 : index
    %94 = vector.load %arg1[%c0_127, %c0_128] : memref<48x128xbf16, #tpu.memory_space<vmem>>, vector<48x128xbf16>
    %c0_129 = arith.constant 0 : index
    %c0_130 = arith.constant 0 : index
    %95 = vector.load %arg4[%c0_129, %c0_130] : memref<128x512xf32, #tpu.memory_space<vmem>>, vector<128x512xf32>
    %96 = arith.truncf %95 : vector<128x512xf32> to vector<128x512xbf16>
    %cst_131 = arith.constant dense<0.000000e+00> : vector<48x512xf32>
    %97 = tpu.matmul %94, %96, %cst_131 {dimension_numbers = #tpu.dot_dimension_numbers<[1], [0], [0], [1], [0, 0, 1, 1], [], []>} : vector<48x128xbf16>, vector<128x512xbf16>, vector<48x512xf32> -> vector<48x512xf32>
    %cst_132 = arith.constant dense<0xFF800000> : vector<512xf32>
    %98 = vector.multi_reduction <maximumf>, %97, %cst_132 [0] : vector<48x512xf32> to vector<512xf32>
    %99 = vector.shape_cast %98 : vector<512xf32> to vector<1x512xf32>
    %100 = tpu.iota {dimensions = array<i32: 0>} : vector<48x512xi32>
    %101 = vector.broadcast %99 : vector<1x512xf32> to vector<48x512xf32>
    %102 = arith.cmpf oeq, %97, %101 : vector<48x512xf32>
    %c48_i32 = arith.constant 48 : i32
    %103 = vector.broadcast %c48_i32 : i32 to vector<48x512xi32>
    %104 = arith.select %102, %100, %103 : vector<48x512xi1>, vector<48x512xi32>
    %cst_133 = arith.constant dense<2147483647> : vector<512xi32>
    %105 = vector.multi_reduction <minsi>, %104, %cst_133 [0] : vector<48x512xi32> to vector<512xi32>
    %106 = vector.shape_cast %105 : vector<512xi32> to vector<1x512xi32>
    %107 = arith.cmpi eq, %106, %106 : vector<1x512xi32>
    %c1_i32 = arith.constant 1 : i32
    %c2_i32 = arith.constant 2 : i32
    %108 = vector.broadcast %c1_i32 : i32 to vector<1x512xi32>
    %109 = vector.broadcast %c2_i32 : i32 to vector<1x512xi32>
    %110 = arith.select %107, %108, %109 : vector<1x512xi1>, vector<1x512xi32>
    %111 = vector.extract_strided_slice %110 {offsets = [0, 10], sizes = [1, 7], strides = [1, 1]} : vector<1x512xi32> to vector<1x7xi32>
    %c0_134 = arith.constant 0 : index
    %c0_135 = arith.constant 0 : index
    %112 = vector.load %arg2[%c0_134, %c0_135] : memref<5x49xi32, #tpu.memory_space<vmem>>, vector<1x7xi32>
    tpu.vector_store %arg2[%c0_134, %c0_135], %111 {strides = array<i32>} : memref<5x49xi32, #tpu.memory_space<vmem>>, vector<1x7xi32>,
    %113 = vector.extract_strided_slice %110 {offsets = [0, 19], sizes = [1, 7], strides = [1, 1]} : vector<1x512xi32> to vector<1x7xi32>
    %c0_136 = arith.constant 0 : index
    %c7_137 = arith.constant 7 : index
    %114 = vector.load %arg2[%c0_136, %c7_137] : memref<5x49xi32, #tpu.memory_space<vmem>>, vector<1x7xi32>
    tpu.vector_store %arg2[%c0_136, %c7_137], %113 {strides = array<i32>} : memref<5x49xi32, #tpu.memory_space<vmem>>, vector<1x7xi32>,
    %115 = vector.extract_strided_slice %110 {offsets = [0, 28], sizes = [1, 7], strides = [1, 1]} : vector<1x512xi32> to vector<1x7xi32>
    %c0_138 = arith.constant 0 : index
    %c14_139 = arith.constant 14 : index
    %116 = vector.load %arg2[%c0_138, %c14_139] : memref<5x49xi32, #tpu.memory_space<vmem>>, vector<1x7xi32>
    tpu.vector_store %arg2[%c0_138, %c14_139], %115 {strides = array<i32>} : memref<5x49xi32, #tpu.memory_space<vmem>>, vector<1x7xi32>,
    %117 = vector.extract_strided_slice %110 {offsets = [0, 37], sizes = [1, 7], strides = [1, 1]} : vector<1x512xi32> to vector<1x7xi32>
    %c0_140 = arith.constant 0 : index
    %c21_141 = arith.constant 21 : index
    %118 = vector.load %arg2[%c0_140, %c21_141] : memref<5x49xi32, #tpu.memory_space<vmem>>, vector<1x7xi32>
    tpu.vector_store %arg2[%c0_140, %c21_141], %117 {strides = array<i32>} : memref<5x49xi32, #tpu.memory_space<vmem>>, vector<1x7xi32>,
    %119 = vector.extract_strided_slice %110 {offsets = [0, 46], sizes = [1, 7], strides = [1, 1]} : vector<1x512xi32> to vector<1x7xi32>
    %c0_142 = arith.constant 0 : index
    %c28_143 = arith.constant 28 : index
    %120 = vector.load %arg2[%c0_142, %c28_143] : memref<5x49xi32, #tpu.memory_space<vmem>>, vector<1x7xi32>
    tpu.vector_store %arg2[%c0_142, %c28_143], %119 {strides = array<i32>} : memref<5x49xi32, #tpu.memory_space<vmem>>, vector<1x7xi32>,
    %121 = vector.extract_strided_slice %110 {offsets = [0, 55], sizes = [1, 7], strides = [1, 1]} : vector<1x512xi32> to vector<1x7xi32>
    %c0_144 = arith.constant 0 : index
    %c35_145 = arith.constant 35 : index
    %122 = vector.load %arg2[%c0_144, %c35_145] : memref<5x49xi32, #tpu.memory_space<vmem>>, vector<1x7xi32>
    tpu.vector_store %arg2[%c0_144, %c35_145], %121 {strides = array<i32>} : memref<5x49xi32, #tpu.memory_space<vmem>>, vector<1x7xi32>,
    %123 = vector.extract_strided_slice %110 {offsets = [0, 64], sizes = [1, 7], strides = [1, 1]} : vector<1x512xi32> to vector<1x7xi32>
    %c0_146 = arith.constant 0 : index
    %c42_147 = arith.constant 42 : index
    %124 = vector.load %arg2[%c0_146, %c42_147] : memref<5x49xi32, #tpu.memory_space<vmem>>, vector<1x7xi32>
    tpu.vector_store %arg2[%c0_146, %c42_147], %123 {strides = array<i32>} : memref<5x49xi32, #tpu.memory_space<vmem>>, vector<1x7xi32>,
    %125 = vector.extract_strided_slice %110 {offsets = [0, 91], sizes = [1, 7], strides = [1, 1]} : vector<1x512xi32> to vector<1x7xi32>
    %c1 = arith.constant 1 : index
    %c0_148 = arith.constant 0 : index
    %126 = vector.load %arg2[%c1, %c0_148] : memref<5x49xi32, #tpu.memory_space<vmem>>, vector<1x7xi32>
    tpu.vector_store %arg2[%c1, %c0_148], %125 {strides = array<i32>} : memref<5x49xi32, #tpu.memory_space<vmem>>, vector<1x7xi32>,
    %127 = vector.extract_strided_slice %110 {offsets = [0, 100], sizes = [1, 7], strides = [1, 1]} : vector<1x512xi32> to vector<1x7xi32>
    %c1_149 = arith.constant 1 : index
    %c7_150 = arith.constant 7 : index
    %128 = vector.load %arg2[%c1_149, %c7_150] : memref<5x49xi32, #tpu.memory_space<vmem>>, vector<1x7xi32>
    tpu.vector_store %arg2[%c1_149, %c7_150], %127 {strides = array<i32>} : memref<5x49xi32, #tpu.memory_space<vmem>>, vector<1x7xi32>,
    %129 = vector.extract_strided_slice %110 {offsets = [0, 109], sizes = [1, 7], strides = [1, 1]} : vector<1x512xi32> to vector<1x7xi32>
    %c1_151 = arith.constant 1 : index
    %c14_152 = arith.constant 14 : index
    %130 = vector.load %arg2[%c1_151, %c14_152] : memref<5x49xi32, #tpu.memory_space<vmem>>, vector<1x7xi32>
    tpu.vector_store %arg2[%c1_151, %c14_152], %129 {strides = array<i32>} : memref<5x49xi32, #tpu.memory_space<vmem>>, vector<1x7xi32>,
    %131 = vector.extract_strided_slice %110 {offsets = [0, 118], sizes = [1, 7], strides = [1, 1]} : vector<1x512xi32> to vector<1x7xi32>
    %c1_153 = arith.constant 1 : index
    %c21_154 = arith.constant 21 : index
    %132 = vector.load %arg2[%c1_153, %c21_154] : memref<5x49xi32, #tpu.memory_space<vmem>>, vector<1x7xi32>
    tpu.vector_store %arg2[%c1_153, %c21_154], %131 {strides = array<i32>} : memref<5x49xi32, #tpu.memory_space<vmem>>, vector<1x7xi32>,
    %133 = vector.extract_strided_slice %110 {offsets = [0, 127], sizes = [1, 7], strides = [1, 1]} : vector<1x512xi32> to vector<1x7xi32>
    %c1_155 = arith.constant 1 : index
    %c28_156 = arith.constant 28 : index
    %134 = vector.load %arg2[%c1_155, %c28_156] : memref<5x49xi32, #tpu.memory_space<vmem>>, vector<1x7xi32>
    tpu.vector_store %arg2[%c1_155, %c28_156], %133 {strides = array<i32>} : memref<5x49xi32, #tpu.memory_space<vmem>>, vector<1x7xi32>,
    %135 = vector.extract_strided_slice %110 {offsets = [0, 136], sizes = [1, 7], strides = [1, 1]} : vector<1x512xi32> to vector<1x7xi32>
    %c1_157 = arith.constant 1 : index
    %c35_158 = arith.constant 35 : index
    %136 = vector.load %arg2[%c1_157, %c35_158] : memref<5x49xi32, #tpu.memory_space<vmem>>, vector<1x7xi32>
    tpu.vector_store %arg2[%c1_157, %c35_158], %135 {strides = array<i32>} : memref<5x49xi32, #tpu.memory_space<vmem>>, vector<1x7xi32>,
    %137 = vector.extract_strided_slice %110 {offsets = [0, 145], sizes = [1, 7], strides = [1, 1]} : vector<1x512xi32> to vector<1x7xi32>
    %c1_159 = arith.constant 1 : index
    %c42_160 = arith.constant 42 : index
    %138 = vector.load %arg2[%c1_159, %c42_160] : memref<5x49xi32, #tpu.memory_space<vmem>>, vector<1x7xi32>
    tpu.vector_store %arg2[%c1_159, %c42_160], %137 {strides = array<i32>} : memref<5x49xi32, #tpu.memory_space<vmem>>, vector<1x7xi32>,
    %139 = vector.extract_strided_slice %110 {offsets = [0, 172], sizes = [1, 7], strides = [1, 1]} : vector<1x512xi32> to vector<1x7xi32>
    %c2 = arith.constant 2 : index
    %c0_161 = arith.constant 0 : index
    %140 = vector.load %arg2[%c2, %c0_161] : memref<5x49xi32, #tpu.memory_space<vmem>>, vector<1x7xi32>
    tpu.vector_store %arg2[%c2, %c0_161], %139 {strides = array<i32>} : memref<5x49xi32, #tpu.memory_space<vmem>>, vector<1x7xi32>,
    %141 = vector.extract_strided_slice %110 {offsets = [0, 181], sizes = [1, 7], strides = [1, 1]} : vector<1x512xi32> to vector<1x7xi32>
    %c2_162 = arith.constant 2 : index
    %c7_163 = arith.constant 7 : index
    %142 = vector.load %arg2[%c2_162, %c7_163] : memref<5x49xi32, #tpu.memory_space<vmem>>, vector<1x7xi32>
    tpu.vector_store %arg2[%c2_162, %c7_163], %141 {strides = array<i32>} : memref<5x49xi32, #tpu.memory_space<vmem>>, vector<1x7xi32>,
    %143 = vector.extract_strided_slice %110 {offsets = [0, 190], sizes = [1, 7], strides = [1, 1]} : vector<1x512xi32> to vector<1x7xi32>
    %c2_164 = arith.constant 2 : index
    %c14_165 = arith.constant 14 : index
    %144 = vector.load %arg2[%c2_164, %c14_165] : memref<5x49xi32, #tpu.memory_space<vmem>>, vector<1x7xi32>
    tpu.vector_store %arg2[%c2_164, %c14_165], %143 {strides = array<i32>} : memref<5x49xi32, #tpu.memory_space<vmem>>, vector<1x7xi32>,
    %145 = vector.extract_strided_slice %110 {offsets = [0, 199], sizes = [1, 7], strides = [1, 1]} : vector<1x512xi32> to vector<1x7xi32>
    %c2_166 = arith.constant 2 : index
    %c21_167 = arith.constant 21 : index
    %146 = vector.load %arg2[%c2_166, %c21_167] : memref<5x49xi32, #tpu.memory_space<vmem>>, vector<1x7xi32>
    tpu.vector_store %arg2[%c2_166, %c21_167], %145 {strides = array<i32>} : memref<5x49xi32, #tpu.memory_space<vmem>>, vector<1x7xi32>,
    %147 = vector.extract_strided_slice %110 {offsets = [0, 208], sizes = [1, 7], strides = [1, 1]} : vector<1x512xi32> to vector<1x7xi32>
    %c2_168 = arith.constant 2 : index
    %c28_169 = arith.constant 28 : index
    %148 = vector.load %arg2[%c2_168, %c28_169] : memref<5x49xi32, #tpu.memory_space<vmem>>, vector<1x7xi32>
    tpu.vector_store %arg2[%c2_168, %c28_169], %147 {strides = array<i32>} : memref<5x49xi32, #tpu.memory_space<vmem>>, vector<1x7xi32>,
    %149 = vector.extract_strided_slice %110 {offsets = [0, 217], sizes = [1, 7], strides = [1, 1]} : vector<1x512xi32> to vector<1x7xi32>
    %c2_170 = arith.constant 2 : index
    %c35_171 = arith.constant 35 : index
    %150 = vector.load %arg2[%c2_170, %c35_171] : memref<5x49xi32, #tpu.memory_space<vmem>>, vector<1x7xi32>
    tpu.vector_store %arg2[%c2_170, %c35_171], %149 {strides = array<i32>} : memref<5x49xi32, #tpu.memory_space<vmem>>, vector<1x7xi32>,
    %151 = vector.extract_strided_slice %110 {offsets = [0, 226], sizes = [1, 7], strides = [1, 1]} : vector<1x512xi32> to vector<1x7xi32>
    %c2_172 = arith.constant 2 : index
    %c42_173 = arith.constant 42 : index
    %152 = vector.load %arg2[%c2_172, %c42_173] : memref<5x49xi32, #tpu.memory_space<vmem>>, vector<1x7xi32>
    tpu.vector_store %arg2[%c2_172, %c42_173], %151 {strides = array<i32>} : memref<5x49xi32, #tpu.memory_space<vmem>>, vector<1x7xi32>,
    %153 = vector.extract_strided_slice %110 {offsets = [0, 253], sizes = [1, 7], strides = [1, 1]} : vector<1x512xi32> to vector<1x7xi32>
    %c3 = arith.constant 3 : index
    %c0_174 = arith.constant 0 : index
    %154 = vector.load %arg2[%c3, %c0_174] : memref<5x49xi32, #tpu.memory_space<vmem>>, vector<1x7xi32>
    tpu.vector_store %arg2[%c3, %c0_174], %153 {strides = array<i32>} : memref<5x49xi32, #tpu.memory_space<vmem>>, vector<1x7xi32>,
    %155 = vector.extract_strided_slice %110 {offsets = [0, 262], sizes = [1, 7], strides = [1, 1]} : vector<1x512xi32> to vector<1x7xi32>
    %c3_175 = arith.constant 3 : index
    %c7_176 = arith.constant 7 : index
    %156 = vector.load %arg2[%c3_175, %c7_176] : memref<5x49xi32, #tpu.memory_space<vmem>>, vector<1x7xi32>
    tpu.vector_store %arg2[%c3_175, %c7_176], %155 {strides = array<i32>} : memref<5x49xi32, #tpu.memory_space<vmem>>, vector<1x7xi32>,
    %157 = vector.extract_strided_slice %110 {offsets = [0, 271], sizes = [1, 7], strides = [1, 1]} : vector<1x512xi32> to vector<1x7xi32>
    %c3_177 = arith.constant 3 : index
    %c14_178 = arith.constant 14 : index
    %158 = vector.load %arg2[%c3_177, %c14_178] : memref<5x49xi32, #tpu.memory_space<vmem>>, vector<1x7xi32>
    tpu.vector_store %arg2[%c3_177, %c14_178], %157 {strides = array<i32>} : memref<5x49xi32, #tpu.memory_space<vmem>>, vector<1x7xi32>,
    %159 = vector.extract_strided_slice %110 {offsets = [0, 280], sizes = [1, 7], strides = [1, 1]} : vector<1x512xi32> to vector<1x7xi32>
    %c3_179 = arith.constant 3 : index
    %c21_180 = arith.constant 21 : index
    %160 = vector.load %arg2[%c3_179, %c21_180] : memref<5x49xi32, #tpu.memory_space<vmem>>, vector<1x7xi32>
    tpu.vector_store %arg2[%c3_179, %c21_180], %159 {strides = array<i32>} : memref<5x49xi32, #tpu.memory_space<vmem>>, vector<1x7xi32>,
    %161 = vector.extract_strided_slice %110 {offsets = [0, 289], sizes = [1, 7], strides = [1, 1]} : vector<1x512xi32> to vector<1x7xi32>
    %c3_181 = arith.constant 3 : index
    %c28_182 = arith.constant 28 : index
    %162 = vector.load %arg2[%c3_181, %c28_182] : memref<5x49xi32, #tpu.memory_space<vmem>>, vector<1x7xi32>
    tpu.vector_store %arg2[%c3_181, %c28_182], %161 {strides = array<i32>} : memref<5x49xi32, #tpu.memory_space<vmem>>, vector<1x7xi32>,
    %163 = vector.extract_strided_slice %110 {offsets = [0, 298], sizes = [1, 7], strides = [1, 1]} : vector<1x512xi32> to vector<1x7xi32>
    %c3_183 = arith.constant 3 : index
    %c35_184 = arith.constant 35 : index
    %164 = vector.load %arg2[%c3_183, %c35_184] : memref<5x49xi32, #tpu.memory_space<vmem>>, vector<1x7xi32>
    tpu.vector_store %arg2[%c3_183, %c35_184], %163 {strides = array<i32>} : memref<5x49xi32, #tpu.memory_space<vmem>>, vector<1x7xi32>,
    %165 = vector.extract_strided_slice %110 {offsets = [0, 307], sizes = [1, 7], strides = [1, 1]} : vector<1x512xi32> to vector<1x7xi32>
    %c3_185 = arith.constant 3 : index
    %c42_186 = arith.constant 42 : index
    %166 = vector.load %arg2[%c3_185, %c42_186] : memref<5x49xi32, #tpu.memory_space<vmem>>, vector<1x7xi32>
    tpu.vector_store %arg2[%c3_185, %c42_186], %165 {strides = array<i32>} : memref<5x49xi32, #tpu.memory_space<vmem>>, vector<1x7xi32>,
    %167 = vector.extract_strided_slice %110 {offsets = [0, 334], sizes = [1, 7], strides = [1, 1]} : vector<1x512xi32> to vector<1x7xi32>
    %c4 = arith.constant 4 : index
    %c0_187 = arith.constant 0 : index
    %168 = vector.load %arg2[%c4, %c0_187] : memref<5x49xi32, #tpu.memory_space<vmem>>, vector<1x7xi32>
    tpu.vector_store %arg2[%c4, %c0_187], %167 {strides = array<i32>} : memref<5x49xi32, #tpu.memory_space<vmem>>, vector<1x7xi32>,
    %169 = vector.extract_strided_slice %110 {offsets = [0, 343], sizes = [1, 7], strides = [1, 1]} : vector<1x512xi32> to vector<1x7xi32>
    %c4_188 = arith.constant 4 : index
    %c7_189 = arith.constant 7 : index
    %170 = vector.load %arg2[%c4_188, %c7_189] : memref<5x49xi32, #tpu.memory_space<vmem>>, vector<1x7xi32>
    tpu.vector_store %arg2[%c4_188, %c7_189], %169 {strides = array<i32>} : memref<5x49xi32, #tpu.memory_space<vmem>>, vector<1x7xi32>,
    %171 = vector.extract_strided_slice %110 {offsets = [0, 352], sizes = [1, 7], strides = [1, 1]} : vector<1x512xi32> to vector<1x7xi32>
    %c4_190 = arith.constant 4 : index
    %c14_191 = arith.constant 14 : index
    %172 = vector.load %arg2[%c4_190, %c14_191] : memref<5x49xi32, #tpu.memory_space<vmem>>, vector<1x7xi32>
    tpu.vector_store %arg2[%c4_190, %c14_191], %171 {strides = array<i32>} : memref<5x49xi32, #tpu.memory_space<vmem>>, vector<1x7xi32>,
    %173 = vector.extract_strided_slice %110 {offsets = [0, 361], sizes = [1, 7], strides = [1, 1]} : vector<1x512xi32> to vector<1x7xi32>
    %c4_192 = arith.constant 4 : index
    %c21_193 = arith.constant 21 : index
    %174 = vector.load %arg2[%c4_192, %c21_193] : memref<5x49xi32, #tpu.memory_space<vmem>>, vector<1x7xi32>
    tpu.vector_store %arg2[%c4_192, %c21_193], %173 {strides = array<i32>} : memref<5x49xi32, #tpu.memory_space<vmem>>, vector<1x7xi32>,
    %175 = vector.extract_strided_slice %110 {offsets = [0, 370], sizes = [1, 7], strides = [1, 1]} : vector<1x512xi32> to vector<1x7xi32>
    %c4_194 = arith.constant 4 : index
    %c28_195 = arith.constant 28 : index
    %176 = vector.load %arg2[%c4_194, %c28_195] : memref<5x49xi32, #tpu.memory_space<vmem>>, vector<1x7xi32>
    tpu.vector_store %arg2[%c4_194, %c28_195], %175 {strides = array<i32>} : memref<5x49xi32, #tpu.memory_space<vmem>>, vector<1x7xi32>,
    %177 = vector.extract_strided_slice %110 {offsets = [0, 379], sizes = [1, 7], strides = [1, 1]} : vector<1x512xi32> to vector<1x7xi32>
    %c4_196 = arith.constant 4 : index
    %c35_197 = arith.constant 35 : index
    %178 = vector.load %arg2[%c4_196, %c35_197] : memref<5x49xi32, #tpu.memory_space<vmem>>, vector<1x7xi32>
    tpu.vector_store %arg2[%c4_196, %c35_197], %177 {strides = array<i32>} : memref<5x49xi32, #tpu.memory_space<vmem>>, vector<1x7xi32>,
    %179 = vector.extract_strided_slice %110 {offsets = [0, 388], sizes = [1, 7], strides = [1, 1]} : vector<1x512xi32> to vector<1x7xi32>
    %c4_198 = arith.constant 4 : index
    %c42_199 = arith.constant 42 : index
    %180 = vector.load %arg2[%c4_198, %c42_199] : memref<5x49xi32, #tpu.memory_space<vmem>>, vector<1x7xi32>
    tpu.vector_store %arg2[%c4_198, %c42_199], %179 {strides = array<i32>} : memref<5x49xi32, #tpu.memory_space<vmem>>, vector<1x7xi32>,
    return
  }
}

</mosaic_0001>

<llo_original>
// kernel: model_forward.1
$region0: #{model_forward.1}
  #allocation0 [shape = 'u32[]', space=smem, size = 0x4, offset = 0x4, fixed_abs, tag = 'smem constant byte address 0x4 - core index']
  #allocation1 [shape = 'u32[144,128]{1,0:T(1,128)}', space=vmem, size = 0x12000, scoped, tag = 'internal scratch']
  #allocation2 [shape = 'f32[8,544]{1,0:T(8,128)}', space=vmem, size = 0x5000, scoped, tag = 'scratch operand']
  #allocation3 [shape = 'f32[128,512]{1,0:T(8,128)}', space=vmem, size = 0x40000, scoped, tag = 'scratch operand']
  %s0 = inlined_call_operand.vmem [shape: f32[25,49], index: 0, kind: input, shape index: {}]
  %s1 = inlined_call_operand.vmem [shape: bf16[48,128], index: 1, kind: input, shape index: {}]
  %s2 = inlined_call_operand.hbm [shape: s32[5,49], index: 2, kind: output, shape index: {}]
  %s3 = sld [smem:[#allocation0]]
  $region18: #{model_forward.1} parent=0
    _
  %s5 = ssub.s32 1, %s3
  %s6 = scalar_select 0, %s5, %s3
  $region1: #{model_forward.1} parent=0
    #allocation4 [shape = 'u8[4096]{0}', space=vmem, size = 0x1000, scoped, tag = 'output window, operand 0, single buffered']
    #allocation5 [shape = 's32[1]{0}', space=sflag, size = 0x4, scoped, tag = 'scoped memory for model_forward.1']
    %7 = vsyncpa [#allocation5], 0
    // Predicated region
    $region2: #{model_forward.1} parent=1 // pred_check
      _
    $region3: #{model_forward.1} parent=1 // pred_check_branch
      %9 = sbr.rel (0) target = $region5
    $region4: #{model_forward.1} parent=1 // pred_region
      _
    $region5: #{model_forward.1} parent=1 // pred_fallthru
      _
    // Predicated region
    $region6: #{model_forward.1} parent=1 // pred_check
      _
    $region7: #{model_forward.1} parent=1 // pred_check_branch
      %11 = sbr.rel (0) target = $region9
    $region8: #{model_forward.1} parent=1 // pred_region
      _
    $region9: #{model_forward.1} parent=1 // pred_fallthru
      _
    %12 = vst [vmem:[#allocation2] sm:$0xff] 0.0
    %13 = vst [vmem:[#allocation2 + $0x8] sm:$0xff] 0.0
    %14 = vst [vmem:[#allocation2 + $0x10] sm:$0xff] 0.0
    %15 = vst [vmem:[#allocation2 + $0x18] sm:$0xff] 0.0
    %vm16 = vcmask 261120
    %17 = vst.msk [vmem:[#allocation2 + $0x20] sm:$0xff] %vm16, 0.0
    %v18 = vld [vmem:[%s0] sm:$0x1f]
    %20 = vrot.lane.b32.xlu0 %v18, 26
    %v21 = vpop.permute.xlu0 %20
    %vm23 = vcmask 266448
    %24 = vst.msk [vmem:[#allocation2] sm:$0x1f] %vm23, %v21
    %v25 = vld [vmem:[%s0] sm:$0x1f]
    %27 = vrot.lane.b32.xlu0 %v25, 28
    %v28 = vpop.permute.xlu0 %27
    %vm30 = vcmask 340248
    %31 = vst.msk [vmem:[#allocation2] sm:$0x1f] %vm30, %v28
    %v32 = vld [vmem:[%s0] sm:$0x1f]
    %34 = vrot.lane.b32.xlu0 %v32, 30
    %v35 = vpop.permute.xlu0 %34
    %vm37 = vcmask 414048
    %38 = vst.msk [vmem:[#allocation2] sm:$0x1f] %vm37, %v35
    %v39 = vld [vmem:[%s0] sm:$0x1f]
    %41 = vrot.lane.b32.xlu0 %v39, 32
    %v42 = vpop.permute.xlu0 %41
    %vm44 = vcmask 487848
    %45 = vst.msk [vmem:[#allocation2] sm:$0x1f] %vm44, %v42
    %v46 = vld [vmem:[%s0] sm:$0x1f]
    %48 = vrot.lane.b32.xlu0 %v46, 34
    %v49 = vpop.permute.xlu0 %48
    %vm51 = vcmask 561648
    %52 = vst.msk [vmem:[#allocation2] sm:$0x1f] %vm51, %v49
    %v53 = vld [vmem:[%s0] sm:$0x1f]
    %55 = vrot.lane.b32.xlu0 %v53, 36
    %v56 = vpop.permute.xlu0 %55
    %vm58 = vcmask 635448
    %59 = vst.msk [vmem:[#allocation2] sm:$0x1f] %vm58, %v56
    %v60 = vld [vmem:[%s0] sm:$0x1f]
    %62 = vrot.lane.b32.xlu0 %v60, 38
    %v63 = vpop.permute.xlu0 %62
    %vm65 = vcmask 709248
    %66 = vst.msk [vmem:[#allocation2] sm:$0x1f] %vm65, %v63
    %v67 = vld [vmem:[%s0 + $0x5] sm:$0x1f]
    %69 = vrot.lane.b32.xlu0 %v67, 107
    %v70 = vpop.permute.xlu0 %69
    %vm72 = vcmask 930648
    %73 = vst.msk [vmem:[#allocation2] sm:$0x1f] %vm72, %v70
    %v74 = vld [vmem:[%s0 + $0x5] sm:$0x1f]
    %76 = vrot.lane.b32.xlu0 %v74, 109
    %v77 = vpop.permute.xlu0 %76
    %vm79 = vcmask 1004448
    %80 = vst.msk [vmem:[#allocation2] sm:$0x1f] %vm79, %v77
    %v81 = vld [vmem:[%s0 + $0x5] sm:$0x1f]
    %83 = vrot.lane.b32.xlu0 %v81, 111
    %v84 = vpop.permute.xlu0 %83
    %vm86 = vcmask 1045480
    %87 = vst.msk [vmem:[#allocation2] sm:$0x1f] %vm86, %v84
    %vm88 = vcmask 28672
    %89 = vst.msk [vmem:[#allocation2 + $0x8] sm:$0x1f] %vm88, %v84
    %v90 = vld [vmem:[%s0 + $0x5] sm:$0x1f]
    %92 = vrot.lane.b32.xlu0 %v90, 113
    %v93 = vpop.permute.xlu0 %92
    %vm95 = vcmask 102448
    %96 = vst.msk [vmem:[#allocation2 + $0x8] sm:$0x1f] %vm95, %v93
    %v97 = vld [vmem:[%s0 + $0x5] sm:$0x1f]
    %99 = vrot.lane.b32.xlu0 %v97, 115
    %v100 = vpop.permute.xlu0 %99
    %vm102 = vcmask 176248
    %103 = vst.msk [vmem:[#allocation2 + $0x8] sm:$0x1f] %vm102, %v100
    %v104 = vld [vmem:[%s0 + $0x5] sm:$0x1f]
    %106 = vrot.lane.b32.xlu0 %v104, 117
    %v107 = vpop.permute.xlu0 %106
    %vm109 = vcmask 250048
    %110 = vst.msk [vmem:[#allocation2 + $0x8] sm:$0x1f] %vm109, %v107
    %v111 = vld [vmem:[%s0 + $0x5] sm:$0x1f]
    %113 = vrot.lane.b32.xlu0 %v111, 119
    %v114 = vpop.permute.xlu0 %113
    %vm116 = vcmask 323848
    %117 = vst.msk [vmem:[#allocation2 + $0x8] sm:$0x1f] %vm116, %v114
    %v118 = vld [vmem:[%s0 + $0xa] sm:$0x1f]
    %120 = vrot.lane.b32.xlu0 %v118, 60
    %v121 = vpop.permute.xlu0 %120
    %vm123 = vcmask 545248
    %124 = vst.msk [vmem:[#allocation2 + $0x8] sm:$0x1f] %vm123, %v121
    %v125 = vld [vmem:[%s0 + $0xa] sm:$0x1f]
    %127 = vrot.lane.b32.xlu0 %v125, 62
    %v128 = vpop.permute.xlu0 %127
    %vm130 = vcmask 619048
    %131 = vst.msk [vmem:[#allocation2 + $0x8] sm:$0x1f] %vm130, %v128
    %v132 = vld [vmem:[%s0 + $0xa] sm:$0x1f]
    %134 = vrot.lane.b32.xlu0 %v132, 64
    %v135 = vpop.permute.xlu0 %134
    %vm137 = vcmask 692848
    %138 = vst.msk [vmem:[#allocation2 + $0x8] sm:$0x1f] %vm137, %v135
    %v139 = vld [vmem:[%s0 + $0xa] sm:$0x1f]
    %141 = vrot.lane.b32.xlu0 %v139, 66
    %v142 = vpop.permute.xlu0 %141
    %vm144 = vcmask 766648
    %145 = vst.msk [vmem:[#allocation2 + $0x8] sm:$0x1f] %vm144, %v142
    %v146 = vld [vmem:[%s0 + $0xa] sm:$0x1f]
    %148 = vrot.lane.b32.xlu0 %v146, 68
    %v149 = vpop.permute.xlu0 %148
    %vm151 = vcmask 840448
    %152 = vst.msk [vmem:[#allocation2 + $0x8] sm:$0x1f] %vm151, %v149
    %v153 = vld [vmem:[%s0 + $0xa] sm:$0x1f]
    %155 = vrot.lane.b32.xlu0 %v153, 70
    %v156 = vpop.permute.xlu0 %155
    %vm158 = vcmask 914248
    %159 = vst.msk [vmem:[#allocation2 + $0x8] sm:$0x1f] %vm158, %v156
    %v160 = vld [vmem:[%s0 + $0xa] sm:$0x1f]
    %162 = vrot.lane.b32.xlu0 %v160, 72
    %v163 = vpop.permute.xlu0 %162
    %vm165 = vcmask 988048
    %166 = vst.msk [vmem:[#allocation2 + $0x8] sm:$0x1f] %vm165, %v163
    %v167 = vld [vmem:[%s0 + $0xf] sm:$0x1f]
    %169 = vrot.lane.b32.xlu0 %v167, 13
    %v170 = vpop.permute.xlu0 %169
    %vm172 = vcmask 159848
    %173 = vst.msk [vmem:[#allocation2 + $0x10] sm:$0x1f] %vm172, %v170
    %v174 = vld [vmem:[%s0 + $0xf] sm:$0x1f]
    %176 = vrot.lane.b32.xlu0 %v174, 15
    %v177 = vpop.permute.xlu0 %176
    %vm179 = vcmask 233648
    %180 = vst.msk [vmem:[#allocation2 + $0x10] sm:$0x1f] %vm179, %v177
    %v181 = vld [vmem:[%s0 + $0xf] sm:$0x1f]
    %183 = vrot.lane.b32.xlu0 %v181, 17
    %v184 = vpop.permute.xlu0 %183
    %vm186 = vcmask 307448
    %187 = vst.msk [vmem:[#allocation2 + $0x10] sm:$0x1f] %vm186, %v184
    %v188 = vld [vmem:[%s0 + $0xf] sm:$0x1f]
    %190 = vrot.lane.b32.xlu0 %v188, 19
    %v191 = vpop.permute.xlu0 %190
    %vm193 = vcmask 381248
    %194 = vst.msk [vmem:[#allocation2 + $0x10] sm:$0x1f] %vm193, %v191
    %v195 = vld [vmem:[%s0 + $0xf] sm:$0x1f]
    %197 = vrot.lane.b32.xlu0 %v195, 21
    %v198 = vpop.permute.xlu0 %197
    %vm200 = vcmask 455048
    %201 = vst.msk [vmem:[#allocation2 + $0x10] sm:$0x1f] %vm200, %v198
    %v202 = vld [vmem:[%s0 + $0xf] sm:$0x1f]
    %204 = vrot.lane.b32.xlu0 %v202, 23
    %v205 = vpop.permute.xlu0 %204
    %vm207 = vcmask 528848
    %208 = vst.msk [vmem:[#allocation2 + $0x10] sm:$0x1f] %vm207, %v205
    %v209 = vld [vmem:[%s0 + $0xf] sm:$0x1f]
    %211 = vrot.lane.b32.xlu0 %v209, 25
    %v212 = vpop.permute.xlu0 %211
    %vm214 = vcmask 602648
    %215 = vst.msk [vmem:[#allocation2 + $0x10] sm:$0x1f] %vm214, %v212
    %v216 = vld [vmem:[%s0 + $0x14] sm:$0x1f]
    %218 = vrot.lane.b32.xlu0 %v216, 94
    %v219 = vpop.permute.xlu0 %218
    %vm221 = vcmask 824048
    %222 = vst.msk [vmem:[#allocation2 + $0x10] sm:$0x1f] %vm221, %v219
    %v223 = vld [vmem:[%s0 + $0x14] sm:$0x1f]
    %225 = vrot.lane.b32.xlu0 %v223, 96
    %v226 = vpop.permute.xlu0 %225
    %vm228 = vcmask 897848
    %229 = vst.msk [vmem:[#allocation2 + $0x10] sm:$0x1f] %vm228, %v226
    %v230 = vld [vmem:[%s0 + $0x14] sm:$0x1f]
    %232 = vrot.lane.b32.xlu0 %v230, 98
    %v233 = vpop.permute.xlu0 %232
    %vm235 = vcmask 971648
    %236 = vst.msk [vmem:[#allocation2 + $0x10] sm:$0x1f] %vm235, %v233
    %v237 = vld [vmem:[%s0 + $0x14] sm:$0x1f]
    %239 = vrot.lane.b32.xlu0 %v237, 100
    %v240 = vpop.permute.xlu0 %239
    %vm242 = vcmask 1045448
    %243 = vst.msk [vmem:[#allocation2 + $0x10] sm:$0x1f] %vm242, %v240
    %v244 = vld [vmem:[%s0 + $0x14] sm:$0x1f]
    %246 = vrot.lane.b32.xlu0 %v244, 102
    %v247 = vpop.permute.xlu0 %246
    %vm249 = vcmask 69648
    %250 = vst.msk [vmem:[#allocation2 + $0x18] sm:$0x1f] %vm249, %v247
    %v251 = vld [vmem:[%s0 + $0x14] sm:$0x1f]
    %253 = vrot.lane.b32.xlu0 %v251, 104
    %v254 = vpop.permute.xlu0 %253
    %vm256 = vcmask 143448
    %257 = vst.msk [vmem:[#allocation2 + $0x18] sm:$0x1f] %vm256, %v254
    %v258 = vld [vmem:[%s0 + $0x14] sm:$0x1f]
    %260 = vrot.lane.b32.xlu0 %v258, 106
    %v261 = vpop.permute.xlu0 %260
    %vm263 = vcmask 217248
    %264 = vst.msk [vmem:[#allocation2 + $0x18] sm:$0x1f] %vm263, %v261
    %265 = vst [vmem:[#allocation3] sm:$0xff] 0.0
    %266 = vst [vmem:[#allocation3 + $0x8] sm:$0xff] 0.0
    %267 = vst [vmem:[#allocation3 + $0x10] sm:$0xff] 0.0
    %268 = vst [vmem:[#allocation3 + $0x18] sm:$0xff] 0.0
    %269 = vst [vmem:[#allocation3 + $0x20] sm:$0xff] 0.0
    %270 = vst [vmem:[#allocation3 + $0x28] sm:$0xff] 0.0
    %271 = vst [vmem:[#allocation3 + $0x30] sm:$0xff] 0.0
    %272 = vst [vmem:[#allocation3 + $0x38] sm:$0xff] 0.0
    %273 = vst [vmem:[#allocation3 + $0x40] sm:$0xff] 0.0
    %274 = vst [vmem:[#allocation3 + $0x48] sm:$0xff] 0.0
    %275 = vst [vmem:[#allocation3 + $0x50] sm:$0xff] 0.0
    %276 = vst [vmem:[#allocation3 + $0x58] sm:$0xff] 0.0
    %277 = vst [vmem:[#allocation3 + $0x60] sm:$0xff] 0.0
    %278 = vst [vmem:[#allocation3 + $0x68] sm:$0xff] 0.0
    %279 = vst [vmem:[#allocation3 + $0x70] sm:$0xff] 0.0
    %280 = vst [vmem:[#allocation3 + $0x78] sm:$0xff] 0.0
    %281 = vst [vmem:[#allocation3 + $0x80] sm:$0xff] 0.0
    %282 = vst [vmem:[#allocation3 + $0x88] sm:$0xff] 0.0
    %283 = vst [vmem:[#allocation3 + $0x90] sm:$0xff] 0.0
    %284 = vst [vmem:[#allocation3 + $0x98] sm:$0xff] 0.0
    %285 = vst [vmem:[#allocation3 + $0xa0] sm:$0xff] 0.0
    %286 = vst [vmem:[#allocation3 + $0xa8] sm:$0xff] 0.0
    %287 = vst [vmem:[#allocation3 + $0xb0] sm:$0xff] 0.0
    %288 = vst [vmem:[#allocation3 + $0xb8] sm:$0xff] 0.0
    %289 = vst [vmem:[#allocation3 + $0xc0] sm:$0xff] 0.0
    %290 = vst [vmem:[#allocation3 + $0xc8] sm:$0xff] 0.0
    %291 = vst [vmem:[#allocation3 + $0xd0] sm:$0xff] 0.0
    %292 = vst [vmem:[#allocation3 + $0xd8] sm:$0xff] 0.0
    %293 = vst [vmem:[#allocation3 + $0xe0] sm:$0xff] 0.0
    %294 = vst [vmem:[#allocation3 + $0xe8] sm:$0xff] 0.0
    %295 = vst [vmem:[#allocation3 + $0xf0] sm:$0xff] 0.0
    %296 = vst [vmem:[#allocation3 + $0xf8] sm:$0xff] 0.0
    %297 = vst [vmem:[#allocation3 + $0x100] sm:$0xff] 0.0
    %298 = vst [vmem:[#allocation3 + $0x108] sm:$0xff] 0.0
    %299 = vst [vmem:[#allocation3 + $0x110] sm:$0xff] 0.0
    %300 = vst [vmem:[#allocation3 + $0x118] sm:$0xff] 0.0
    %301 = vst [vmem:[#allocation3 + $0x120] sm:$0xff] 0.0
    %302 = vst [vmem:[#allocation3 + $0x128] sm:$0xff] 0.0
    %303 = vst [vmem:[#allocation3 + $0x130] sm:$0xff] 0.0
    %304 = vst [vmem:[#allocation3 + $0x138] sm:$0xff] 0.0
    %305 = vst [vmem:[#allocation3 + $0x140] sm:$0xff] 0.0
    %306 = vst [vmem:[#allocation3 + $0x148] sm:$0xff] 0.0
    %307 = vst [vmem:[#allocation3 + $0x150] sm:$0xff] 0.0
    %308 = vst [vmem:[#allocation3 + $0x158] sm:$0xff] 0.0
    %309 = vst [vmem:[#allocation3 + $0x160] sm:$0xff] 0.0
    %310 = vst [vmem:[#allocation3 + $0x168] sm:$0xff] 0.0
    %311 = vst [vmem:[#allocation3 + $0x170] sm:$0xff] 0.0
    %312 = vst [vmem:[#allocation3 + $0x178] sm:$0xff] 0.0
    %313 = vst [vmem:[#allocation3 + $0x180] sm:$0xff] 0.0
    %314 = vst [vmem:[#allocation3 + $0x188] sm:$0xff] 0.0
    %315 = vst [vmem:[#allocation3 + $0x190] sm:$0xff] 0.0
    %316 = vst [vmem:[#allocation3 + $0x198] sm:$0xff] 0.0
    %317 = vst [vmem:[#allocation3 + $0x1a0] sm:$0xff] 0.0
    %318 = vst [vmem:[#allocation3 + $0x1a8] sm:$0xff] 0.0
    %319 = vst [vmem:[#allocation3 + $0x1b0] sm:$0xff] 0.0
    %320 = vst [vmem:[#allocation3 + $0x1b8] sm:$0xff] 0.0
    %321 = vst [vmem:[#allocation3 + $0x1c0] sm:$0xff] 0.0
    %322 = vst [vmem:[#allocation3 + $0x1c8] sm:$0xff] 0.0
    %323 = vst [vmem:[#allocation3 + $0x1d0] sm:$0xff] 0.0
    %324 = vst [vmem:[#allocation3 + $0x1d8] sm:$0xff] 0.0
    %325 = vst [vmem:[#allocation3 + $0x1e0] sm:$0xff] 0.0
    %326 = vst [vmem:[#allocation3 + $0x1e8] sm:$0xff] 0.0
    %327 = vst [vmem:[#allocation3 + $0x1f0] sm:$0xff] 0.0
    %328 = vst [vmem:[#allocation3 + $0x1f8] sm:$0xff] 0.0
    %v329 = vld [vmem:[#allocation2] sm:$0xff]
    %v330 = vld [vmem:[#allocation2 + $0x8] sm:$0xff]
    %v331 = vld [vmem:[#allocation2 + $0x10] sm:$0xff]
    %v332 = vld [vmem:[#allocation2 + $0x18] sm:$0xff]
    %v333 = vld [vmem:[#allocation2 + $0x20] sm:$0xff]
    %339 = vrot.lane.b32.xlu0 %v329, 122
    %v340 = vpop.permute.xlu0 %339
    %341 = vrot.lane.b32.xlu0 %v330, 122
    %v342 = vpop.permute.xlu0 %341
    %343 = vrot.lane.b32.xlu0 %v331, 122
    %v344 = vpop.permute.xlu0 %343
    %345 = vrot.lane.b32.xlu0 %v332, 122
    %v346 = vpop.permute.xlu0 %345
    %347 = vrot.lane.b32.xlu0 %v333, 122
    %v348 = vpop.permute.xlu0 %347
    %vm349 = vcmask 998400
    %v350 = vsel %vm349, %v340, %v342
    %v351 = vsel %vm349, %v342, %v344
    %v352 = vsel %vm349, %v344, %v346
    %v353 = vsel %vm349, %v346, %v348
    %358 = vst [vmem:[#allocation3] sm:$0xff] %v350
    %359 = vst [vmem:[#allocation3 + $0x8] sm:$0xff] %v351
    %360 = vst [vmem:[#allocation3 + $0x10] sm:$0xff] %v352
    %361 = vst [vmem:[#allocation3 + $0x18] sm:$0xff] %v353
    %v362 = vld [vmem:[#allocation2] sm:$0xff]
    %v363 = vld [vmem:[#allocation2 + $0x8] sm:$0xff]
    %v364 = vld [vmem:[#allocation2 + $0x10] sm:$0xff]
    %v365 = vld [vmem:[#allocation2 + $0x18] sm:$0xff]
    %v366 = vld [vmem:[#allocation2 + $0x20] sm:$0xff]
    %372 = vrot.lane.b32.xlu0 %v362, 121
    %v373 = vpop.permute.xlu0 %372
    %374 = vrot.lane.b32.xlu0 %v363, 121
    %v375 = vpop.permute.xlu0 %374
    %376 = vrot.lane.b32.xlu0 %v364, 121
    %v377 = vpop.permute.xlu0 %376
    %378 = vrot.lane.b32.xlu0 %v365, 121
    %v379 = vpop.permute.xlu0 %378
    %380 = vrot.lane.b32.xlu0 %v366, 121
    %v381 = vpop.permute.xlu0 %380
    %vm382 = vcmask 990208
    %v383 = vsel %vm382, %v373, %v375
    %v384 = vsel %vm382, %v375, %v377
    %v385 = vsel %vm382, %v377, %v379
    %v386 = vsel %vm382, %v379, %v381
    %391 = vst [vmem:[#allocation3 + $0x20] sm:$0xff] %v383
    %392 = vst [vmem:[#allocation3 + $0x28] sm:$0xff] %v384
    %393 = vst [vmem:[#allocation3 + $0x30] sm:$0xff] %v385
    %394 = vst [vmem:[#allocation3 + $0x38] sm:$0xff] %v386
    %v395 = vld [vmem:[#allocation2] sm:$0xff]
    %v396 = vld [vmem:[#allocation2 + $0x8] sm:$0xff]
    %v397 = vld [vmem:[#allocation2 + $0x10] sm:$0xff]
    %v398 = vld [vmem:[#allocation2 + $0x18] sm:$0xff]
    %v399 = vld [vmem:[#allocation2 + $0x20] sm:$0xff]
    %405 = vrot.lane.b32.xlu0 %v395, 120
    %v406 = vpop.permute.xlu0 %405
    %407 = vrot.lane.b32.xlu0 %v396, 120
    %v408 = vpop.permute.xlu0 %407
    %409 = vrot.lane.b32.xlu0 %v397, 120
    %v410 = vpop.permute.xlu0 %409
    %411 = vrot.lane.b32.xlu0 %v398, 120
    %v412 = vpop.permute.xlu0 %411
    %413 = vrot.lane.b32.xlu0 %v399, 120
    %v414 = vpop.permute.xlu0 %413
    %vm415 = vcmask 982016
    %v416 = vsel %vm415, %v406, %v408
    %v417 = vsel %vm415, %v408, %v410
    %v418 = vsel %vm415, %v410, %v412
    %v419 = vsel %vm415, %v412, %v414
    %424 = vst [vmem:[#allocation3 + $0x40] sm:$0xff] %v416
    %425 = vst [vmem:[#allocation3 + $0x48] sm:$0xff] %v417
    %426 = vst [vmem:[#allocation3 + $0x50] sm:$0xff] %v418
    %427 = vst [vmem:[#allocation3 + $0x58] sm:$0xff] %v419
    %v428 = vld [vmem:[#allocation2] sm:$0xff]
    %v429 = vld [vmem:[#allocation2 + $0x8] sm:$0xff]
    %v430 = vld [vmem:[#allocation2 + $0x10] sm:$0xff]
    %v431 = vld [vmem:[#allocation2 + $0x18] sm:$0xff]
    %v432 = vld [vmem:[#allocation2 + $0x20] sm:$0xff]
    %438 = vrot.lane.b32.xlu0 %v428, 113
    %v439 = vpop.permute.xlu0 %438
    %440 = vrot.lane.b32.xlu0 %v429, 113
    %v441 = vpop.permute.xlu0 %440
    %442 = vrot.lane.b32.xlu0 %v430, 113
    %v443 = vpop.permute.xlu0 %442
    %444 = vrot.lane.b32.xlu0 %v431, 113
    %v445 = vpop.permute.xlu0 %444
    %446 = vrot.lane.b32.xlu0 %v432, 113
    %v447 = vpop.permute.xlu0 %446
    %vm448 = vcmask 924672
    %v449 = vsel %vm448, %v439, %v441
    %v450 = vsel %vm448, %v441, %v443
    %v451 = vsel %vm448, %v443, %v445
    %v452 = vsel %vm448, %v445, %v447
    %457 = vst [vmem:[#allocation3 + $0x60] sm:$0xff] %v449
    %458 = vst [vmem:[#allocation3 + $0x68] sm:$0xff] %v450
    %459 = vst [vmem:[#allocation3 + $0x70] sm:$0xff] %v451
    %460 = vst [vmem:[#allocation3 + $0x78] sm:$0xff] %v452
    %v461 = vld [vmem:[#allocation2] sm:$0xff]
    %v462 = vld [vmem:[#allocation2 + $0x8] sm:$0xff]
    %v463 = vld [vmem:[#allocation2 + $0x10] sm:$0xff]
    %v464 = vld [vmem:[#allocation2 + $0x18] sm:$0xff]
    %v465 = vld [vmem:[#allocation2 + $0x20] sm:$0xff]
    %471 = vrot.lane.b32.xlu0 %v461, 112
    %v472 = vpop.permute.xlu0 %471
    %473 = vrot.lane.b32.xlu0 %v462, 112
    %v474 = vpop.permute.xlu0 %473
    %475 = vrot.lane.b32.xlu0 %v463, 112
    %v476 = vpop.permute.xlu0 %475
    %477 = vrot.lane.b32.xlu0 %v464, 112
    %v478 = vpop.permute.xlu0 %477
    %479 = vrot.lane.b32.xlu0 %v465, 112
    %v480 = vpop.permute.xlu0 %479
    %vm481 = vcmask 916480
    %v482 = vsel %vm481, %v472, %v474
    %v483 = vsel %vm481, %v474, %v476
    %v484 = vsel %vm481, %v476, %v478
    %v485 = vsel %vm481, %v478, %v480
    %490 = vst [vmem:[#allocation3 + $0x80] sm:$0xff] %v482
    %491 = vst [vmem:[#allocation3 + $0x88] sm:$0xff] %v483
    %492 = vst [vmem:[#allocation3 + $0x90] sm:$0xff] %v484
    %493 = vst [vmem:[#allocation3 + $0x98] sm:$0xff] %v485
    %v494 = vld [vmem:[#allocation2] sm:$0xff]
    %v495 = vld [vmem:[#allocation2 + $0x8] sm:$0xff]
    %v496 = vld [vmem:[#allocation2 + $0x10] sm:$0xff]
    %v497 = vld [vmem:[#allocation2 + $0x18] sm:$0xff]
    %v498 = vld [vmem:[#allocation2 + $0x20] sm:$0xff]
    %504 = vrot.lane.b32.xlu0 %v494, 111
    %v505 = vpop.permute.xlu0 %504
    %506 = vrot.lane.b32.xlu0 %v495, 111
    %v507 = vpop.permute.xlu0 %506
    %508 = vrot.lane.b32.xlu0 %v496, 111
    %v509 = vpop.permute.xlu0 %508
    %510 = vrot.lane.b32.xlu0 %v497, 111
    %v511 = vpop.permute.xlu0 %510
    %512 = vrot.lane.b32.xlu0 %v498, 111
    %v513 = vpop.permute.xlu0 %512
    %vm514 = vcmask 908288
    %v515 = vsel %vm514, %v505, %v507
    %v516 = vsel %vm514, %v507, %v509
    %v517 = vsel %vm514, %v509, %v511
    %v518 = vsel %vm514, %v511, %v513
    %523 = vst [vmem:[#allocation3 + $0xa0] sm:$0xff] %v515
    %524 = vst [vmem:[#allocation3 + $0xa8] sm:$0xff] %v516
    %525 = vst [vmem:[#allocation3 + $0xb0] sm:$0xff] %v517
    %526 = vst [vmem:[#allocation3 + $0xb8] sm:$0xff] %v518
    %v527 = vld [vmem:[#allocation2] sm:$0xff]
    %v528 = vld [vmem:[#allocation2 + $0x8] sm:$0xff]
    %v529 = vld [vmem:[#allocation2 + $0x10] sm:$0xff]
    %v530 = vld [vmem:[#allocation2 + $0x18] sm:$0xff]
    %v531 = vld [vmem:[#allocation2 + $0x20] sm:$0xff]
    %537 = vrot.lane.b32.xlu0 %v527, 104
    %v538 = vpop.permute.xlu0 %537
    %539 = vrot.lane.b32.xlu0 %v528, 104
    %v540 = vpop.permute.xlu0 %539
    %541 = vrot.lane.b32.xlu0 %v529, 104
    %v542 = vpop.permute.xlu0 %541
    %543 = vrot.lane.b32.xlu0 %v530, 104
    %v544 = vpop.permute.xlu0 %543
    %545 = vrot.lane.b32.xlu0 %v531, 104
    %v546 = vpop.permute.xlu0 %545
    %vm547 = vcmask 850944
    %v548 = vsel %vm547, %v538, %v540
    %v549 = vsel %vm547, %v540, %v542
    %v550 = vsel %vm547, %v542, %v544
    %v551 = vsel %vm547, %v544, %v546
    %556 = vst [vmem:[#allocation3 + $0xc0] sm:$0xff] %v548
    %557 = vst [vmem:[#allocation3 + $0xc8] sm:$0xff] %v549
    %558 = vst [vmem:[#allocation3 + $0xd0] sm:$0xff] %v550
    %559 = vst [vmem:[#allocation3 + $0xd8] sm:$0xff] %v551
    %v560 = vld [vmem:[#allocation2] sm:$0xff]
    %v561 = vld [vmem:[#allocation2 + $0x8] sm:$0xff]
    %v562 = vld [vmem:[#allocation2 + $0x10] sm:$0xff]
    %v563 = vld [vmem:[#allocation2 + $0x18] sm:$0xff]
    %v564 = vld [vmem:[#allocation2 + $0x20] sm:$0xff]
    %570 = vrot.lane.b32.xlu0 %v560, 103
    %v571 = vpop.permute.xlu0 %570
    %572 = vrot.lane.b32.xlu0 %v561, 103
    %v573 = vpop.permute.xlu0 %572
    %574 = vrot.lane.b32.xlu0 %v562, 103
    %v575 = vpop.permute.xlu0 %574
    %576 = vrot.lane.b32.xlu0 %v563, 103
    %v577 = vpop.permute.xlu0 %576
    %578 = vrot.lane.b32.xlu0 %v564, 103
    %v579 = vpop.permute.xlu0 %578
    %vm580 = vcmask 842752
    %v581 = vsel %vm580, %v571, %v573
    %v582 = vsel %vm580, %v573, %v575
    %v583 = vsel %vm580, %v575, %v577
    %v584 = vsel %vm580, %v577, %v579
    %589 = vst [vmem:[#allocation3 + $0xe0] sm:$0xff] %v581
    %590 = vst [vmem:[#allocation3 + $0xe8] sm:$0xff] %v582
    %591 = vst [vmem:[#allocation3 + $0xf0] sm:$0xff] %v583
    %592 = vst [vmem:[#allocation3 + $0xf8] sm:$0xff] %v584
    %v593 = vld [vmem:[#allocation2] sm:$0xff]
    %v594 = vld [vmem:[#allocation2 + $0x8] sm:$0xff]
    %v595 = vld [vmem:[#allocation2 + $0x10] sm:$0xff]
    %v596 = vld [vmem:[#allocation2 + $0x18] sm:$0xff]
    %v597 = vld [vmem:[#allocation2 + $0x20] sm:$0xff]
    %603 = vrot.lane.b32.xlu0 %v593, 102
    %v604 = vpop.permute.xlu0 %603
    %605 = vrot.lane.b32.xlu0 %v594, 102
    %v606 = vpop.permute.xlu0 %605
    %607 = vrot.lane.b32.xlu0 %v595, 102
    %v608 = vpop.permute.xlu0 %607
    %609 = vrot.lane.b32.xlu0 %v596, 102
    %v610 = vpop.permute.xlu0 %609
    %611 = vrot.lane.b32.xlu0 %v597, 102
    %v612 = vpop.permute.xlu0 %611
    %vm613 = vcmask 834560
    %v614 = vsel %vm613, %v604, %v606
    %v615 = vsel %vm613, %v606, %v608
    %v616 = vsel %vm613, %v608, %v610
    %v617 = vsel %vm613, %v610, %v612
    %622 = vst [vmem:[#allocation3 + $0x100] sm:$0xff] %v614
    %623 = vst [vmem:[#allocation3 + $0x108] sm:$0xff] %v615
    %624 = vst [vmem:[#allocation3 + $0x110] sm:$0xff] %v616
    %625 = vst [vmem:[#allocation3 + $0x118] sm:$0xff] %v617
    %v626 = vlaneseq
    %vm627 = vcmp.ge.s32.totalorder %v626, 0
    %vm628 = vcmp.lt.s32.totalorder %v626, 512
    %vm629 = vmand %vm627, %vm628
    %s630 = scalar_lea.vmem [#allocation3], 288
    %631 = vst.msk [vmem:[%s630] ss:$8 sm:$0xf] %vm629, 1.0
    %632 = vst.msk [vmem:[%s630] ss:$8 sm:$0x0] %vm629, 1.0
    %vm633 = vcmask 49152
    %634 = vst.msk [vmem:[#allocation4] sm:$0x1] %vm633, 1
    %vm635 = vcmask 106552
    %636 = vst.msk [vmem:[#allocation4] sm:$0x1] %vm635, 1
    %vm637 = vcmask 163952
    %638 = vst.msk [vmem:[#allocation4] sm:$0x1] %vm637, 1
    %vm639 = vcmask 221352
    %640 = vst.msk [vmem:[#allocation4] sm:$0x1] %vm639, 1
    %vm641 = vcmask 278752
    %642 = vst.msk [vmem:[#allocation4] sm:$0x1] %vm641, 1
    %vm643 = vcmask 336152
    %644 = vst.msk [vmem:[#allocation4] sm:$0x1] %vm643, 1
    %vm645 = vcmask 393552
    %646 = vst.msk [vmem:[#allocation4] sm:$0x1] %vm645, 1
    %647 = vst.msk [vmem:[#allocation4 + $0x1] sm:$0x1] %vm633, 1
    %648 = vst.msk [vmem:[#allocation4 + $0x1] sm:$0x1] %vm635, 1
    %649 = vst.msk [vmem:[#allocation4 + $0x1] sm:$0x1] %vm637, 1
    %650 = vst.msk [vmem:[#allocation4 + $0x1] sm:$0x1] %vm639, 1
    %651 = vst.msk [vmem:[#allocation4 + $0x1] sm:$0x1] %vm641, 1
    %652 = vst.msk [vmem:[#allocation4 + $0x1] sm:$0x1] %vm643, 1
    %653 = vst.msk [vmem:[#allocation4 + $0x1] sm:$0x1] %vm645, 1
    %654 = vst.msk [vmem:[#allocation4 + $0x2] sm:$0x1] %vm633, 1
    %655 = vst.msk [vmem:[#allocation4 + $0x2] sm:$0x1] %vm635, 1
    %656 = vst.msk [vmem:[#allocation4 + $0x2] sm:$0x1] %vm637, 1
    %657 = vst.msk [vmem:[#allocation4 + $0x2] sm:$0x1] %vm639, 1
    %658 = vst.msk [vmem:[#allocation4 + $0x2] sm:$0x1] %vm641, 1
    %659 = vst.msk [vmem:[#allocation4 + $0x2] sm:$0x1] %vm643, 1
    %660 = vst.msk [vmem:[#allocation4 + $0x2] sm:$0x1] %vm645, 1
    %661 = vst.msk [vmem:[#allocation4 + $0x3] sm:$0x1] %vm633, 1
    %662 = vst.msk [vmem:[#allocation4 + $0x3] sm:$0x1] %vm635, 1
    %663 = vst.msk [vmem:[#allocation4 + $0x3] sm:$0x1] %vm637, 1
    %664 = vst.msk [vmem:[#allocation4 + $0x3] sm:$0x1] %vm639, 1
    %665 = vst.msk [vmem:[#allocation4 + $0x3] sm:$0x1] %vm641, 1
    %666 = vst.msk [vmem:[#allocation4 + $0x3] sm:$0x1] %vm643, 1
    %667 = vst.msk [vmem:[#allocation4 + $0x3] sm:$0x1] %vm645, 1
    %668 = vst.msk [vmem:[#allocation4 + $0x4] sm:$0x1] %vm633, 1
    %669 = vst.msk [vmem:[#allocation4 + $0x4] sm:$0x1] %vm635, 1
    %670 = vst.msk [vmem:[#allocation4 + $0x4] sm:$0x1] %vm637, 1
    %671 = vst.msk [vmem:[#allocation4 + $0x4] sm:$0x1] %vm639, 1
    %672 = vst.msk [vmem:[#allocation4 + $0x4] sm:$0x1] %vm641, 1
    %673 = vst.msk [vmem:[#allocation4 + $0x4] sm:$0x1] %vm643, 1
    %674 = vst.msk [vmem:[#allocation4 + $0x4] sm:$0x1] %vm645, 1
    // Predicated region
    $region10: #{model_forward.1} parent=1 // pred_check
      _
    $region11: #{model_forward.1} parent=1 // pred_check_branch
      %676 = sbr.rel (0) target = $region13
    $region12: #{model_forward.1} parent=1 // pred_region
      %s678 = ssub.s32 128, 128
      %679 = vsyncadd [#allocation5], %s678
      %s681 = sshll.u32 [#allocation4], 4
      %s682 = int_to_ptr.vmem [resolvable:$true] %s681
      %684 = dma.vmem_to_hbm [thread:$0]  %s682, 128, %s2, [#allocation5]
    $region13: #{model_forward.1} parent=1 // pred_fallthru
      _
    // Predicated region
    $region14: #{model_forward.1} parent=1 // pred_check
      _
    $region15: #{model_forward.1} parent=1 // pred_check_branch
      %686 = sbr.rel (0) target = $region17
    $region16: #{model_forward.1} parent=1 // pred_region
      %687 = dma.done [#allocation5], 128
    $region17: #{model_forward.1} parent=1 // pred_fallthru
      _
    %688 = vsyncpa [#allocation5], 1

</llo_original>
